<compile_context>
chip_gen: v5e
topology: v5e:2x2
jax: 0.10.0
libtpu: 0.0.40
codegen_flags: <defaults>
</compile_context>

<pallas_src>
import functools

import jax
import jax.numpy as jnp
from jax.experimental import pallas as pl
from jax.experimental.pallas import tpu as pltpu


# ----------------------------- in-kernel helpers -----------------------------

def _rmsnorm(x, w, eps=1e-5):
    # x: (T, D), w: (1, D)
    ms = jnp.mean(x * x, axis=-1, keepdims=True)
    return x * jax.lax.rsqrt(ms + eps) * w


def _gelu(x):
    # Matches the reference module exactly (0.44715).
    return 0.5 * x * (1.0 + jnp.tanh(jnp.sqrt(2.0 / jnp.pi) * (x + 0.44715 * x * x * x)))


# ----------------------------- fused Pallas kernel ----------------------------

def fused_llm_kernel(x_ref,        # (T, D)     per-batch activation tile
                     n1_ref,       # (L, D)
                     wqkv_ref,     # (L, D, 3D) -- 1/sqrt(hd) folded into Q cols
                     wo_ref,       # (L, D, D)
                     bo_ref,       # (L, D)
                     n2_ref,       # (L, D)
                     w1_ref,       # (L, D, 4D)
                     b1_ref,       # (L, 4D)
                     w2_ref,       # (L, 4D, D)
                     b2_ref,       # (L, D)
                     fn_ref,       # (1, D)
                     wout_ref,     # (D, V)
                     o_ref,        # (T, V)
                     ctx_ref,      # VMEM scratch (T, D)
                     *, num_heads, num_layers):
    x = x_ref[...]                 # (T, D) f32; stays resident across all layers
    T, D = x.shape
    hd = D // num_heads

    # TODO(synk): make `l` a streamed "arbitrary" grid axis once L grows beyond
    # what fits resident in VMEM (esp. v7x's 64 MiB).
    for l in range(num_layers):
        # ---- attention sub-block (pre-norm, residual) ----
        xn = _rmsnorm(x, n1_ref[l:l + 1, :])
        # single fused QKV projection: (T, D) @ (D, 3D) -> (T, 3D)
        qkv = jnp.dot(xn, wqkv_ref[l], preferred_element_type=jnp.float32)
        for h in range(num_heads):                       # static unroll (H small)
            q = qkv[:, h * hd:(h + 1) * hd]
            k = qkv[:, D + h * hd:D + (h + 1) * hd]
            v = qkv[:, 2 * D + h * hd:2 * D + (h + 1) * hd]
            # scale already folded into Wq; causal mask intentionally NOT
            # applied (masked_fill result unused in the reference module).
            s = jnp.dot(q, k.T, preferred_element_type=jnp.float32)     # (T, T)
            m = jnp.max(s, axis=-1, keepdims=True)
            e = jnp.exp(s - m)
            denom = jnp.sum(e, axis=-1, keepdims=True)
            p = e * pl.reciprocal(denom, approx=True)                   # EUP recip
            ctx_ref[:, h * hd:(h + 1) * hd] = jnp.dot(
                p, v, preferred_element_type=jnp.float32)               # (T, hd)
        # single full-width output projection: (T, D) @ (D, D)
        attn = jnp.dot(ctx_ref[...], wo_ref[l], preferred_element_type=jnp.float32)
        x = x + attn + bo_ref[l:l + 1, :]

        # ---- feedforward sub-block (pre-norm, residual) ----
        xn2 = _rmsnorm(x, n2_ref[l:l + 1, :])
        h1 = _gelu(jnp.dot(xn2, w1_ref[l], preferred_element_type=jnp.float32)
                   + b1_ref[l:l + 1, :])
        x = x + jnp.dot(h1, w2_ref[l], preferred_element_type=jnp.float32) \
              + b2_ref[l:l + 1, :]

    # ---- final norm + lane-dense logits store ----
    xn = _rmsnorm(x, fn_ref[...])
    o_ref[...] = jnp.dot(xn, wout_ref[...], preferred_element_type=jnp.float32)


# ----------------------------- wrapper -----------------------------------------

def _const_spec(w):
    # Weight is identical for every grid step -> constant block index, so the
    # pipeline keeps it resident in VMEM instead of re-DMA-ing per batch.
    nd = w.ndim
    return pl.BlockSpec(w.shape, lambda b, nd=nd: (0,) * nd)


def llm_forward(in_idx, params, cfg):
    B, T = in_idx.shape
    D = cfg["emb_dim"]
    V = cfg["vocab_size"]
    H = cfg["n_heads"]
    L = cfg["n_layers"]
    assert T <= cfg["context_length"], "sequence longer than context_length"

    # ---- embedding (glue: tiny gather + add in plain JAX) ----
    tok = jnp.take(params["tok_emb"], in_idx, axis=0)          # (B, T, D)
    pos = params["pos_emb"][:T][None, :, :]                    # (1, T, D)
    x = (tok + pos).astype(jnp.float32)                        # (B, T, D)
    # dropout(drop_rate=0.0) -> identity

    weights = (params["n1"], params["wqkv"], params["wo"], params["bo"],
               params["n2"], params["w1"], params["b1"], params["w2"],
               params["b2"], params["final_norm_w"], params["out_head_w"])

    logits = pl.pallas_call(
        functools.partial(fused_llm_kernel, num_heads=H, num_layers=L),
        out_shape=jax.ShapeDtypeStruct((B, T, V), jnp.float32),
        grid=(B,),
        in_specs=[pl.BlockSpec((None, T, D), lambda b: (b, 0, 0))]
                 + [_const_spec(w) for w in weights],
        out_specs=pl.BlockSpec((None, T, V), lambda b: (b, 0, 0)),
        scratch_shapes=[pltpu.VMEM((T, D), jnp.float32)],
        compiler_params=pltpu.CompilerParams(
            dimension_semantics=("parallel",)),   # shards batch across v7x's 2 TCs
    )(x, *weights)

    return logits


# ----------------------------- parameter init ----------------------------------

def init_params(key, cfg):
    D = cfg["emb_dim"]
    V = cfg["vocab_size"]
    C = cfg["context_length"]
    H = cfg["n_heads"]
    L = cfg["n_layers"]
    hd = D // H
    scale = 1.0 / (hd ** 0.5)

    def normal(k, shape):
        return 0.02 * jax.random.normal(k, shape, dtype=jnp.float32)

    keys = jax.random.split(key, 3 + L)
    params = {
        "tok_emb": normal(keys[0], (V, D)),
        "pos_emb": normal(keys[1], (C, D)),
        "final_norm_w": jnp.ones((1, D), jnp.float32),
        "out_head_w": normal(keys[2], (D, V)),       # (in, out); no bias
    }

    n1, wqkv, wo, bo, n2, w1, b1, w2, b2 = ([] for _ in range(9))
    for li in range(L):
        lk = jax.random.split(keys[3 + li], 6)
        wq = normal(lk[0], (D, D))                   # stored (in, out); qkv_bias=False
        wk = normal(lk[1], (D, D))
        wv = normal(lk[2], (D, D))
        n1.append(jnp.ones((D,), jnp.float32))
        # fuse Q|K|V and fold the 1/sqrt(head_dim) score scale into Wq
        wqkv.append(jnp.concatenate([wq * scale, wk, wv], axis=-1))   # (D, 3D)
        wo.append(normal(lk[3], (D, D)))
        bo.append(jnp.zeros((D,), jnp.float32))
        n2.append(jnp.ones((D,), jnp.float32))
        w1.append(normal(lk[4], (D, 4 * D)))
        b1.append(jnp.zeros((4 * D,), jnp.float32))
        w2.append(normal(lk[5], (4 * D, D)))
        b2.append(jnp.zeros((D,), jnp.float32))

    params.update({
        "n1": jnp.stack(n1),
        "wqkv": jnp.stack(wqkv),
        "wo": jnp.stack(wo),
        "bo": jnp.stack(bo),
        "n2": jnp.stack(n2),
        "w1": jnp.stack(w1),
        "b1": jnp.stack(b1),
        "w2": jnp.stack(w2),
        "b2": jnp.stack(b2),
    })
    return params


# ----------------------------- main ---------------------------------------------

if __name__ == "__main__":
    cfg = {
        "vocab_size": 128,
        "context_length": 16,
        "emb_dim": 32,
        "n_heads": 4,
        "n_layers": 2,
        "drop_rate": 0.0,
        "qkv_bias": False,
    }

    key = jax.random.PRNGKey(0)
    pkey, ikey = jax.random.split(key)
    params = init_params(pkey, cfg)

    B, T = 2, 8
    in_idx = jax.random.randint(ikey, (B, T), 0, cfg["vocab_size"], dtype=jnp.int32)

    logits = llm_forward(in_idx, params, cfg)
    logits = jax.block_until_ready(logits)
    assert logits.shape == (B, T, cfg["vocab_size"])
    assert bool(jnp.all(jnp.isfinite(logits)))
    print("KERNEL_OK")
</pallas_src>

<mosaic_0001>
module attributes {stable_mosaic.version = 11 : i64} {
  func.func @fused_llm_kernel(%arg0: i32, %arg1: memref<1x8x32xf32, #tpu.memory_space<vmem>>, %arg2: memref<2x32xf32, #tpu.memory_space<vmem>>, %arg3: memref<2x32x96xf32, #tpu.memory_space<vmem>>, %arg4: memref<2x32x32xf32, #tpu.memory_space<vmem>>, %arg5: memref<2x32xf32, #tpu.memory_space<vmem>>, %arg6: memref<2x32xf32, #tpu.memory_space<vmem>>, %arg7: memref<2x32x128xf32, #tpu.memory_space<vmem>>, %arg8: memref<2x128xf32, #tpu.memory_space<vmem>>, %arg9: memref<2x128x32xf32, #tpu.memory_space<vmem>>, %arg10: memref<2x32xf32, #tpu.memory_space<vmem>>, %arg11: memref<1x32xf32, #tpu.memory_space<vmem>>, %arg12: memref<32x128xf32, #tpu.memory_space<vmem>>, %arg13: memref<1x8x128xf32, #tpu.memory_space<vmem>>, %arg14: memref<8x32xf32, #tpu.memory_space<vmem>>) attributes {dimension_semantics = [#tpu.dimension_semantics<parallel>], iteration_bounds = array<i64: 2>, scalar_prefetch = 0 : i64, scratch_operands = 1 : i64, tpu.core_type = #tpu.core_type<tc>, window_params = [{transform_indices = @transform_0, window_bounds = array<i64: 1, 8, 32>}, {pipeline_mode = #tpu.pipeline_mode<synchronous>, transform_indices = @transform_1, window_bounds = array<i64: 2, 32>}, {pipeline_mode = #tpu.pipeline_mode<synchronous>, transform_indices = @transform_2, window_bounds = array<i64: 2, 32, 96>}, {pipeline_mode = #tpu.pipeline_mode<synchronous>, transform_indices = @transform_3, window_bounds = array<i64: 2, 32, 32>}, {pipeline_mode = #tpu.pipeline_mode<synchronous>, transform_indices = @transform_4, window_bounds = array<i64: 2, 32>}, {pipeline_mode = #tpu.pipeline_mode<synchronous>, transform_indices = @transform_5, window_bounds = array<i64: 2, 32>}, {pipeline_mode = #tpu.pipeline_mode<synchronous>, transform_indices = @transform_6, window_bounds = array<i64: 2, 32, 128>}, {pipeline_mode = #tpu.pipeline_mode<synchronous>, transform_indices = @transform_7, window_bounds = array<i64: 2, 128>}, {pipeline_mode = #tpu.pipeline_mode<synchronous>, transform_indices = @transform_8, window_bounds = array<i64: 2, 128, 32>}, {pipeline_mode = #tpu.pipeline_mode<synchronous>, transform_indices = @transform_9, window_bounds = array<i64: 2, 32>}, {pipeline_mode = #tpu.pipeline_mode<synchronous>, transform_indices = @transform_10, window_bounds = array<i64: 1, 32>}, {pipeline_mode = #tpu.pipeline_mode<synchronous>, transform_indices = @transform_11, window_bounds = array<i64: 32, 128>}, {transform_indices = @transform_12, window_bounds = array<i64: 1, 8, 128>}]} {
    %c0 = arith.constant 0 : index
    %c0_0 = arith.constant 0 : index
    %c0_1 = arith.constant 0 : index
    %0 = vector.load %arg1[%c0, %c0_0, %c0_1] : memref<1x8x32xf32, #tpu.memory_space<vmem>>, vector<1x8x32xf32>
    %1 = vector.shape_cast %0 : vector<1x8x32xf32> to vector<8x32xf32>
    %c0_2 = arith.constant 0 : index
    %c0_3 = arith.constant 0 : index
    %2 = vector.load %arg2[%c0_2, %c0_3] : memref<2x32xf32, #tpu.memory_space<vmem>>, vector<1x32xf32>
    %3 = arith.mulf %1, %1 : vector<8x32xf32>
    %cst = arith.constant dense<0.000000e+00> : vector<8xf32>
    %4 = vector.multi_reduction <add>, %3, %cst [1] : vector<8x32xf32> to vector<8xf32>
    %5 = vector.shape_cast %4 : vector<8xf32> to vector<8x1xf32>
    %cst_4 = arith.constant 3.200000e+01 : f32
    %6 = vector.broadcast %cst_4 : f32 to vector<8x1xf32>
    %7 = arith.divf %5, %6 : vector<8x1xf32>
    %cst_5 = arith.constant 9.99999974E-6 : f32
    %8 = vector.broadcast %cst_5 : f32 to vector<8x1xf32>
    %9 = arith.addf %7, %8 : vector<8x1xf32>
    %10 = math.rsqrt %9 : vector<8x1xf32>
    %11 = vector.broadcast %10 : vector<8x1xf32> to vector<8x32xf32>
    %12 = arith.mulf %1, %11 : vector<8x32xf32>
    %13 = vector.broadcast %2 : vector<1x32xf32> to vector<8x32xf32>
    %14 = arith.mulf %12, %13 : vector<8x32xf32>
    %c0_6 = arith.constant 0 : index
    %c0_7 = arith.constant 0 : index
    %c0_8 = arith.constant 0 : index
    %15 = vector.load %arg3[%c0_6, %c0_7, %c0_8] : memref<2x32x96xf32, #tpu.memory_space<vmem>>, vector<1x32x96xf32>
    %16 = vector.shape_cast %15 : vector<1x32x96xf32> to vector<32x96xf32>
    %cst_9 = arith.constant dense<0.000000e+00> : vector<8x96xf32>
    %17 = tpu.matmul %14, %16, %cst_9 {dimension_numbers = #tpu.dot_dimension_numbers<[1], [0], [0], [1], [0, 0, 1, 1], [], []>} : vector<8x32xf32>, vector<32x96xf32>, vector<8x96xf32> -> vector<8x96xf32>
    %18 = vector.extract_strided_slice %17 {offsets = [0, 0], sizes = [8, 8], strides = [1, 1]} : vector<8x96xf32> to vector<8x8xf32>
    %19 = vector.extract_strided_slice %17 {offsets = [0, 32], sizes = [8, 8], strides = [1, 1]} : vector<8x96xf32> to vector<8x8xf32>
    %20 = vector.extract_strided_slice %17 {offsets = [0, 64], sizes = [8, 8], strides = [1, 1]} : vector<8x96xf32> to vector<8x8xf32>
    %21 = tpu.transpose %19, [1, 0] : vector<8x8xf32> -> vector<8x8xf32>
    %cst_10 = arith.constant dense<0.000000e+00> : vector<8x8xf32>
    %22 = tpu.matmul %18, %21, %cst_10 {dimension_numbers = #tpu.dot_dimension_numbers<[1], [0], [0], [1], [0, 0, 1, 1], [], []>} : vector<8x8xf32>, vector<8x8xf32>, vector<8x8xf32> -> vector<8x8xf32>
    %cst_11 = arith.constant dense<0xFF800000> : vector<8xf32>
    %23 = vector.multi_reduction <maximumf>, %22, %cst_11 [1] : vector<8x8xf32> to vector<8xf32>
    %24 = vector.shape_cast %23 : vector<8xf32> to vector<8x1xf32>
    %25 = vector.broadcast %24 : vector<8x1xf32> to vector<8x8xf32>
    %26 = arith.subf %22, %25 : vector<8x8xf32>
    %27 = math.exp %26 : vector<8x8xf32>
    %cst_12 = arith.constant dense<0.000000e+00> : vector<8xf32>
    %28 = vector.multi_reduction <add>, %27, %cst_12 [1] : vector<8x8xf32> to vector<8xf32>
    %29 = vector.shape_cast %28 : vector<8xf32> to vector<8x1xf32>
    %30 = tpu.reciprocal %29 {approx = true} : vector<8x1xf32> -> vector<8x1xf32>
    %31 = vector.broadcast %30 : vector<8x1xf32> to vector<8x8xf32>
    %32 = arith.mulf %27, %31 : vector<8x8xf32>
    %cst_13 = arith.constant dense<0.000000e+00> : vector<8x8xf32>
    %33 = tpu.matmul %32, %20, %cst_13 {dimension_numbers = #tpu.dot_dimension_numbers<[1], [0], [0], [1], [0, 0, 1, 1], [], []>} : vector<8x8xf32>, vector<8x8xf32>, vector<8x8xf32> -> vector<8x8xf32>
    %c0_14 = arith.constant 0 : index
    %c0_15 = arith.constant 0 : index
    %34 = vector.load %arg14[%c0_14, %c0_15] : memref<8x32xf32, #tpu.memory_space<vmem>>, vector<8x8xf32>
    tpu.vector_store %arg14[%c0_14, %c0_15], %33 {strides = array<i32>} : memref<8x32xf32, #tpu.memory_space<vmem>>, vector<8x8xf32>,
    %35 = vector.extract_strided_slice %17 {offsets = [0, 8], sizes = [8, 8], strides = [1, 1]} : vector<8x96xf32> to vector<8x8xf32>
    %36 = vector.extract_strided_slice %17 {offsets = [0, 40], sizes = [8, 8], strides = [1, 1]} : vector<8x96xf32> to vector<8x8xf32>
    %37 = vector.extract_strided_slice %17 {offsets = [0, 72], sizes = [8, 8], strides = [1, 1]} : vector<8x96xf32> to vector<8x8xf32>
    %38 = tpu.transpose %36, [1, 0] : vector<8x8xf32> -> vector<8x8xf32>
    %cst_16 = arith.constant dense<0.000000e+00> : vector<8x8xf32>
    %39 = tpu.matmul %35, %38, %cst_16 {dimension_numbers = #tpu.dot_dimension_numbers<[1], [0], [0], [1], [0, 0, 1, 1], [], []>} : vector<8x8xf32>, vector<8x8xf32>, vector<8x8xf32> -> vector<8x8xf32>
    %cst_17 = arith.constant dense<0xFF800000> : vector<8xf32>
    %40 = vector.multi_reduction <maximumf>, %39, %cst_17 [1] : vector<8x8xf32> to vector<8xf32>
    %41 = vector.shape_cast %40 : vector<8xf32> to vector<8x1xf32>
    %42 = vector.broadcast %41 : vector<8x1xf32> to vector<8x8xf32>
    %43 = arith.subf %39, %42 : vector<8x8xf32>
    %44 = math.exp %43 : vector<8x8xf32>
    %cst_18 = arith.constant dense<0.000000e+00> : vector<8xf32>
    %45 = vector.multi_reduction <add>, %44, %cst_18 [1] : vector<8x8xf32> to vector<8xf32>
    %46 = vector.shape_cast %45 : vector<8xf32> to vector<8x1xf32>
    %47 = tpu.reciprocal %46 {approx = true} : vector<8x1xf32> -> vector<8x1xf32>
    %48 = vector.broadcast %47 : vector<8x1xf32> to vector<8x8xf32>
    %49 = arith.mulf %44, %48 : vector<8x8xf32>
    %cst_19 = arith.constant dense<0.000000e+00> : vector<8x8xf32>
    %50 = tpu.matmul %49, %37, %cst_19 {dimension_numbers = #tpu.dot_dimension_numbers<[1], [0], [0], [1], [0, 0, 1, 1], [], []>} : vector<8x8xf32>, vector<8x8xf32>, vector<8x8xf32> -> vector<8x8xf32>
    %c0_20 = arith.constant 0 : index
    %c8 = arith.constant 8 : index
    %51 = vector.load %arg14[%c0_20, %c8] : memref<8x32xf32, #tpu.memory_space<vmem>>, vector<8x8xf32>
    tpu.vector_store %arg14[%c0_20, %c8], %50 {strides = array<i32>} : memref<8x32xf32, #tpu.memory_space<vmem>>, vector<8x8xf32>,
    %52 = vector.extract_strided_slice %17 {offsets = [0, 16], sizes = [8, 8], strides = [1, 1]} : vector<8x96xf32> to vector<8x8xf32>
    %53 = vector.extract_strided_slice %17 {offsets = [0, 48], sizes = [8, 8], strides = [1, 1]} : vector<8x96xf32> to vector<8x8xf32>
    %54 = vector.extract_strided_slice %17 {offsets = [0, 80], sizes = [8, 8], strides = [1, 1]} : vector<8x96xf32> to vector<8x8xf32>
    %55 = tpu.transpose %53, [1, 0] : vector<8x8xf32> -> vector<8x8xf32>
    %cst_21 = arith.constant dense<0.000000e+00> : vector<8x8xf32>
    %56 = tpu.matmul %52, %55, %cst_21 {dimension_numbers = #tpu.dot_dimension_numbers<[1], [0], [0], [1], [0, 0, 1, 1], [], []>} : vector<8x8xf32>, vector<8x8xf32>, vector<8x8xf32> -> vector<8x8xf32>
    %cst_22 = arith.constant dense<0xFF800000> : vector<8xf32>
    %57 = vector.multi_reduction <maximumf>, %56, %cst_22 [1] : vector<8x8xf32> to vector<8xf32>
    %58 = vector.shape_cast %57 : vector<8xf32> to vector<8x1xf32>
    %59 = vector.broadcast %58 : vector<8x1xf32> to vector<8x8xf32>
    %60 = arith.subf %56, %59 : vector<8x8xf32>
    %61 = math.exp %60 : vector<8x8xf32>
    %cst_23 = arith.constant dense<0.000000e+00> : vector<8xf32>
    %62 = vector.multi_reduction <add>, %61, %cst_23 [1] : vector<8x8xf32> to vector<8xf32>
    %63 = vector.shape_cast %62 : vector<8xf32> to vector<8x1xf32>
    %64 = tpu.reciprocal %63 {approx = true} : vector<8x1xf32> -> vector<8x1xf32>
    %65 = vector.broadcast %64 : vector<8x1xf32> to vector<8x8xf32>
    %66 = arith.mulf %61, %65 : vector<8x8xf32>
    %cst_24 = arith.constant dense<0.000000e+00> : vector<8x8xf32>
    %67 = tpu.matmul %66, %54, %cst_24 {dimension_numbers = #tpu.dot_dimension_numbers<[1], [0], [0], [1], [0, 0, 1, 1], [], []>} : vector<8x8xf32>, vector<8x8xf32>, vector<8x8xf32> -> vector<8x8xf32>
    %c0_25 = arith.constant 0 : index
    %c16 = arith.constant 16 : index
    %68 = vector.load %arg14[%c0_25, %c16] : memref<8x32xf32, #tpu.memory_space<vmem>>, vector<8x8xf32>
    tpu.vector_store %arg14[%c0_25, %c16], %67 {strides = array<i32>} : memref<8x32xf32, #tpu.memory_space<vmem>>, vector<8x8xf32>,
    %69 = vector.extract_strided_slice %17 {offsets = [0, 24], sizes = [8, 8], strides = [1, 1]} : vector<8x96xf32> to vector<8x8xf32>
    %70 = vector.extract_strided_slice %17 {offsets = [0, 56], sizes = [8, 8], strides = [1, 1]} : vector<8x96xf32> to vector<8x8xf32>
    %71 = vector.extract_strided_slice %17 {offsets = [0, 88], sizes = [8, 8], strides = [1, 1]} : vector<8x96xf32> to vector<8x8xf32>
    %72 = tpu.transpose %70, [1, 0] : vector<8x8xf32> -> vector<8x8xf32>
    %cst_26 = arith.constant dense<0.000000e+00> : vector<8x8xf32>
    %73 = tpu.matmul %69, %72, %cst_26 {dimension_numbers = #tpu.dot_dimension_numbers<[1], [0], [0], [1], [0, 0, 1, 1], [], []>} : vector<8x8xf32>, vector<8x8xf32>, vector<8x8xf32> -> vector<8x8xf32>
    %cst_27 = arith.constant dense<0xFF800000> : vector<8xf32>
    %74 = vector.multi_reduction <maximumf>, %73, %cst_27 [1] : vector<8x8xf32> to vector<8xf32>
    %75 = vector.shape_cast %74 : vector<8xf32> to vector<8x1xf32>
    %76 = vector.broadcast %75 : vector<8x1xf32> to vector<8x8xf32>
    %77 = arith.subf %73, %76 : vector<8x8xf32>
    %78 = math.exp %77 : vector<8x8xf32>
    %cst_28 = arith.constant dense<0.000000e+00> : vector<8xf32>
    %79 = vector.multi_reduction <add>, %78, %cst_28 [1] : vector<8x8xf32> to vector<8xf32>
    %80 = vector.shape_cast %79 : vector<8xf32> to vector<8x1xf32>
    %81 = tpu.reciprocal %80 {approx = true} : vector<8x1xf32> -> vector<8x1xf32>
    %82 = vector.broadcast %81 : vector<8x1xf32> to vector<8x8xf32>
    %83 = arith.mulf %78, %82 : vector<8x8xf32>
    %cst_29 = arith.constant dense<0.000000e+00> : vector<8x8xf32>
    %84 = tpu.matmul %83, %71, %cst_29 {dimension_numbers = #tpu.dot_dimension_numbers<[1], [0], [0], [1], [0, 0, 1, 1], [], []>} : vector<8x8xf32>, vector<8x8xf32>, vector<8x8xf32> -> vector<8x8xf32>
    %c0_30 = arith.constant 0 : index
    %c24 = arith.constant 24 : index
    %85 = vector.load %arg14[%c0_30, %c24] : memref<8x32xf32, #tpu.memory_space<vmem>>, vector<8x8xf32>
    tpu.vector_store %arg14[%c0_30, %c24], %84 {strides = array<i32>} : memref<8x32xf32, #tpu.memory_space<vmem>>, vector<8x8xf32>,
    %c0_31 = arith.constant 0 : index
    %c0_32 = arith.constant 0 : index
    %86 = vector.load %arg14[%c0_31, %c0_32] : memref<8x32xf32, #tpu.memory_space<vmem>>, vector<8x32xf32>
    %c0_33 = arith.constant 0 : index
    %c0_34 = arith.constant 0 : index
    %c0_35 = arith.constant 0 : index
    %87 = vector.load %arg4[%c0_33, %c0_34, %c0_35] : memref<2x32x32xf32, #tpu.memory_space<vmem>>, vector<1x32x32xf32>
    %88 = vector.shape_cast %87 : vector<1x32x32xf32> to vector<32x32xf32>
    %cst_36 = arith.constant dense<0.000000e+00> : vector<8x32xf32>
    %89 = tpu.matmul %86, %88, %cst_36 {dimension_numbers = #tpu.dot_dimension_numbers<[1], [0], [0], [1], [0, 0, 1, 1], [], []>} : vector<8x32xf32>, vector<32x32xf32>, vector<8x32xf32> -> vector<8x32xf32>
    %90 = arith.addf %1, %89 : vector<8x32xf32>
    %c0_37 = arith.constant 0 : index
    %c0_38 = arith.constant 0 : index
    %91 = vector.load %arg5[%c0_37, %c0_38] : memref<2x32xf32, #tpu.memory_space<vmem>>, vector<1x32xf32>
    %92 = vector.broadcast %91 : vector<1x32xf32> to vector<8x32xf32>
    %93 = arith.addf %90, %92 : vector<8x32xf32>
    %c0_39 = arith.constant 0 : index
    %c0_40 = arith.constant 0 : index
    %94 = vector.load %arg6[%c0_39, %c0_40] : memref<2x32xf32, #tpu.memory_space<vmem>>, vector<1x32xf32>
    %95 = arith.mulf %93, %93 : vector<8x32xf32>
    %cst_41 = arith.constant dense<0.000000e+00> : vector<8xf32>
    %96 = vector.multi_reduction <add>, %95, %cst_41 [1] : vector<8x32xf32> to vector<8xf32>
    %97 = vector.shape_cast %96 : vector<8xf32> to vector<8x1xf32>
    %cst_42 = arith.constant 3.200000e+01 : f32
    %98 = vector.broadcast %cst_42 : f32 to vector<8x1xf32>
    %99 = arith.divf %97, %98 : vector<8x1xf32>
    %cst_43 = arith.constant 9.99999974E-6 : f32
    %100 = vector.broadcast %cst_43 : f32 to vector<8x1xf32>
    %101 = arith.addf %99, %100 : vector<8x1xf32>
    %102 = math.rsqrt %101 : vector<8x1xf32>
    %103 = vector.broadcast %102 : vector<8x1xf32> to vector<8x32xf32>
    %104 = arith.mulf %93, %103 : vector<8x32xf32>
    %105 = vector.broadcast %94 : vector<1x32xf32> to vector<8x32xf32>
    %106 = arith.mulf %104, %105 : vector<8x32xf32>
    %c0_44 = arith.constant 0 : index
    %c0_45 = arith.constant 0 : index
    %c0_46 = arith.constant 0 : index
    %107 = vector.load %arg7[%c0_44, %c0_45, %c0_46] : memref<2x32x128xf32, #tpu.memory_space<vmem>>, vector<1x32x128xf32>
    %108 = vector.shape_cast %107 : vector<1x32x128xf32> to vector<32x128xf32>
    %cst_47 = arith.constant dense<0.000000e+00> : vector<8x128xf32>
    %109 = tpu.matmul %106, %108, %cst_47 {dimension_numbers = #tpu.dot_dimension_numbers<[1], [0], [0], [1], [0, 0, 1, 1], [], []>} : vector<8x32xf32>, vector<32x128xf32>, vector<8x128xf32> -> vector<8x128xf32>
    %c0_48 = arith.constant 0 : index
    %c0_49 = arith.constant 0 : index
    %110 = vector.load %arg8[%c0_48, %c0_49] : memref<2x128xf32, #tpu.memory_space<vmem>>, vector<1x128xf32>
    %111 = vector.broadcast %110 : vector<1x128xf32> to vector<8x128xf32>
    %112 = arith.addf %109, %111 : vector<8x128xf32>
    %cst_50 = arith.constant 5.000000e-01 : f32
    %113 = vector.broadcast %cst_50 : f32 to vector<8x128xf32>
    %114 = arith.mulf %113, %112 : vector<8x128xf32>
    %cst_51 = arith.constant 0.636619746 : f32
    %115 = math.sqrt %cst_51 : f32
    %cst_52 = arith.constant 4.471500e-01 : f32
    %116 = vector.broadcast %cst_52 : f32 to vector<8x128xf32>
    %117 = arith.mulf %116, %112 : vector<8x128xf32>
    %118 = arith.mulf %117, %112 : vector<8x128xf32>
    %119 = arith.mulf %118, %112 : vector<8x128xf32>
    %120 = arith.addf %112, %119 : vector<8x128xf32>
    %121 = vector.broadcast %115 : f32 to vector<8x128xf32>
    %122 = arith.mulf %121, %120 : vector<8x128xf32>
    %123 = math.tanh %122 : vector<8x128xf32>
    %cst_53 = arith.constant 1.000000e+00 : f32
    %124 = vector.broadcast %cst_53 : f32 to vector<8x128xf32>
    %125 = arith.addf %124, %123 : vector<8x128xf32>
    %126 = arith.mulf %114, %125 : vector<8x128xf32>
    %c0_54 = arith.constant 0 : index
    %c0_55 = arith.constant 0 : index
    %c0_56 = arith.constant 0 : index
    %127 = vector.load %arg9[%c0_54, %c0_55, %c0_56] : memref<2x128x32xf32, #tpu.memory_space<vmem>>, vector<1x128x32xf32>
    %128 = vector.shape_cast %127 : vector<1x128x32xf32> to vector<128x32xf32>
    %cst_57 = arith.constant dense<0.000000e+00> : vector<8x32xf32>
    %129 = tpu.matmul %126, %128, %cst_57 {dimension_numbers = #tpu.dot_dimension_numbers<[1], [0], [0], [1], [0, 0, 1, 1], [], []>} : vector<8x128xf32>, vector<128x32xf32>, vector<8x32xf32> -> vector<8x32xf32>
    %130 = arith.addf %93, %129 : vector<8x32xf32>
    %c0_58 = arith.constant 0 : index
    %c0_59 = arith.constant 0 : index
    %131 = vector.load %arg10[%c0_58, %c0_59] : memref<2x32xf32, #tpu.memory_space<vmem>>, vector<1x32xf32>
    %132 = vector.broadcast %131 : vector<1x32xf32> to vector<8x32xf32>
    %133 = arith.addf %130, %132 : vector<8x32xf32>
    %c1 = arith.constant 1 : index
    %c0_60 = arith.constant 0 : index
    %134 = vector.load %arg2[%c1, %c0_60] : memref<2x32xf32, #tpu.memory_space<vmem>>, vector<1x32xf32>
    %135 = arith.mulf %133, %133 : vector<8x32xf32>
    %cst_61 = arith.constant dense<0.000000e+00> : vector<8xf32>
    %136 = vector.multi_reduction <add>, %135, %cst_61 [1] : vector<8x32xf32> to vector<8xf32>
    %137 = vector.shape_cast %136 : vector<8xf32> to vector<8x1xf32>
    %cst_62 = arith.constant 3.200000e+01 : f32
    %138 = vector.broadcast %cst_62 : f32 to vector<8x1xf32>
    %139 = arith.divf %137, %138 : vector<8x1xf32>
    %cst_63 = arith.constant 9.99999974E-6 : f32
    %140 = vector.broadcast %cst_63 : f32 to vector<8x1xf32>
    %141 = arith.addf %139, %140 : vector<8x1xf32>
    %142 = math.rsqrt %141 : vector<8x1xf32>
    %143 = vector.broadcast %142 : vector<8x1xf32> to vector<8x32xf32>
    %144 = arith.mulf %133, %143 : vector<8x32xf32>
    %145 = vector.broadcast %134 : vector<1x32xf32> to vector<8x32xf32>
    %146 = arith.mulf %144, %145 : vector<8x32xf32>
    %c1_64 = arith.constant 1 : index
    %c0_65 = arith.constant 0 : index
    %c0_66 = arith.constant 0 : index
    %147 = vector.load %arg3[%c1_64, %c0_65, %c0_66] : memref<2x32x96xf32, #tpu.memory_space<vmem>>, vector<1x32x96xf32>
    %148 = vector.shape_cast %147 : vector<1x32x96xf32> to vector<32x96xf32>
    %cst_67 = arith.constant dense<0.000000e+00> : vector<8x96xf32>
    %149 = tpu.matmul %146, %148, %cst_67 {dimension_numbers = #tpu.dot_dimension_numbers<[1], [0], [0], [1], [0, 0, 1, 1], [], []>} : vector<8x32xf32>, vector<32x96xf32>, vector<8x96xf32> -> vector<8x96xf32>
    %150 = vector.extract_strided_slice %149 {offsets = [0, 0], sizes = [8, 8], strides = [1, 1]} : vector<8x96xf32> to vector<8x8xf32>
    %151 = vector.extract_strided_slice %149 {offsets = [0, 32], sizes = [8, 8], strides = [1, 1]} : vector<8x96xf32> to vector<8x8xf32>
    %152 = vector.extract_strided_slice %149 {offsets = [0, 64], sizes = [8, 8], strides = [1, 1]} : vector<8x96xf32> to vector<8x8xf32>
    %153 = tpu.transpose %151, [1, 0] : vector<8x8xf32> -> vector<8x8xf32>
    %cst_68 = arith.constant dense<0.000000e+00> : vector<8x8xf32>
    %154 = tpu.matmul %150, %153, %cst_68 {dimension_numbers = #tpu.dot_dimension_numbers<[1], [0], [0], [1], [0, 0, 1, 1], [], []>} : vector<8x8xf32>, vector<8x8xf32>, vector<8x8xf32> -> vector<8x8xf32>
    %cst_69 = arith.constant dense<0xFF800000> : vector<8xf32>
    %155 = vector.multi_reduction <maximumf>, %154, %cst_69 [1] : vector<8x8xf32> to vector<8xf32>
    %156 = vector.shape_cast %155 : vector<8xf32> to vector<8x1xf32>
    %157 = vector.broadcast %156 : vector<8x1xf32> to vector<8x8xf32>
    %158 = arith.subf %154, %157 : vector<8x8xf32>
    %159 = math.exp %158 : vector<8x8xf32>
    %cst_70 = arith.constant dense<0.000000e+00> : vector<8xf32>
    %160 = vector.multi_reduction <add>, %159, %cst_70 [1] : vector<8x8xf32> to vector<8xf32>
    %161 = vector.shape_cast %160 : vector<8xf32> to vector<8x1xf32>
    %162 = tpu.reciprocal %161 {approx = true} : vector<8x1xf32> -> vector<8x1xf32>
    %163 = vector.broadcast %162 : vector<8x1xf32> to vector<8x8xf32>
    %164 = arith.mulf %159, %163 : vector<8x8xf32>
    %cst_71 = arith.constant dense<0.000000e+00> : vector<8x8xf32>
    %165 = tpu.matmul %164, %152, %cst_71 {dimension_numbers = #tpu.dot_dimension_numbers<[1], [0], [0], [1], [0, 0, 1, 1], [], []>} : vector<8x8xf32>, vector<8x8xf32>, vector<8x8xf32> -> vector<8x8xf32>
    %c0_72 = arith.constant 0 : index
    %c0_73 = arith.constant 0 : index
    %166 = vector.load %arg14[%c0_72, %c0_73] : memref<8x32xf32, #tpu.memory_space<vmem>>, vector<8x8xf32>
    tpu.vector_store %arg14[%c0_72, %c0_73], %165 {strides = array<i32>} : memref<8x32xf32, #tpu.memory_space<vmem>>, vector<8x8xf32>,
    %167 = vector.extract_strided_slice %149 {offsets = [0, 8], sizes = [8, 8], strides = [1, 1]} : vector<8x96xf32> to vector<8x8xf32>
    %168 = vector.extract_strided_slice %149 {offsets = [0, 40], sizes = [8, 8], strides = [1, 1]} : vector<8x96xf32> to vector<8x8xf32>
    %169 = vector.extract_strided_slice %149 {offsets = [0, 72], sizes = [8, 8], strides = [1, 1]} : vector<8x96xf32> to vector<8x8xf32>
    %170 = tpu.transpose %168, [1, 0] : vector<8x8xf32> -> vector<8x8xf32>
    %cst_74 = arith.constant dense<0.000000e+00> : vector<8x8xf32>
    %171 = tpu.matmul %167, %170, %cst_74 {dimension_numbers = #tpu.dot_dimension_numbers<[1], [0], [0], [1], [0, 0, 1, 1], [], []>} : vector<8x8xf32>, vector<8x8xf32>, vector<8x8xf32> -> vector<8x8xf32>
    %cst_75 = arith.constant dense<0xFF800000> : vector<8xf32>
    %172 = vector.multi_reduction <maximumf>, %171, %cst_75 [1] : vector<8x8xf32> to vector<8xf32>
    %173 = vector.shape_cast %172 : vector<8xf32> to vector<8x1xf32>
    %174 = vector.broadcast %173 : vector<8x1xf32> to vector<8x8xf32>
    %175 = arith.subf %171, %174 : vector<8x8xf32>
    %176 = math.exp %175 : vector<8x8xf32>
    %cst_76 = arith.constant dense<0.000000e+00> : vector<8xf32>
    %177 = vector.multi_reduction <add>, %176, %cst_76 [1] : vector<8x8xf32> to vector<8xf32>
    %178 = vector.shape_cast %177 : vector<8xf32> to vector<8x1xf32>
    %179 = tpu.reciprocal %178 {approx = true} : vector<8x1xf32> -> vector<8x1xf32>
    %180 = vector.broadcast %179 : vector<8x1xf32> to vector<8x8xf32>
    %181 = arith.mulf %176, %180 : vector<8x8xf32>
    %cst_77 = arith.constant dense<0.000000e+00> : vector<8x8xf32>
    %182 = tpu.matmul %181, %169, %cst_77 {dimension_numbers = #tpu.dot_dimension_numbers<[1], [0], [0], [1], [0, 0, 1, 1], [], []>} : vector<8x8xf32>, vector<8x8xf32>, vector<8x8xf32> -> vector<8x8xf32>
    %c0_78 = arith.constant 0 : index
    %c8_79 = arith.constant 8 : index
    %183 = vector.load %arg14[%c0_78, %c8_79] : memref<8x32xf32, #tpu.memory_space<vmem>>, vector<8x8xf32>
    tpu.vector_store %arg14[%c0_78, %c8_79], %182 {strides = array<i32>} : memref<8x32xf32, #tpu.memory_space<vmem>>, vector<8x8xf32>,
    %184 = vector.extract_strided_slice %149 {offsets = [0, 16], sizes = [8, 8], strides = [1, 1]} : vector<8x96xf32> to vector<8x8xf32>
    %185 = vector.extract_strided_slice %149 {offsets = [0, 48], sizes = [8, 8], strides = [1, 1]} : vector<8x96xf32> to vector<8x8xf32>
    %186 = vector.extract_strided_slice %149 {offsets = [0, 80], sizes = [8, 8], strides = [1, 1]} : vector<8x96xf32> to vector<8x8xf32>
    %187 = tpu.transpose %185, [1, 0] : vector<8x8xf32> -> vector<8x8xf32>
    %cst_80 = arith.constant dense<0.000000e+00> : vector<8x8xf32>
    %188 = tpu.matmul %184, %187, %cst_80 {dimension_numbers = #tpu.dot_dimension_numbers<[1], [0], [0], [1], [0, 0, 1, 1], [], []>} : vector<8x8xf32>, vector<8x8xf32>, vector<8x8xf32> -> vector<8x8xf32>
    %cst_81 = arith.constant dense<0xFF800000> : vector<8xf32>
    %189 = vector.multi_reduction <maximumf>, %188, %cst_81 [1] : vector<8x8xf32> to vector<8xf32>
    %190 = vector.shape_cast %189 : vector<8xf32> to vector<8x1xf32>
    %191 = vector.broadcast %190 : vector<8x1xf32> to vector<8x8xf32>
    %192 = arith.subf %188, %191 : vector<8x8xf32>
    %193 = math.exp %192 : vector<8x8xf32>
    %cst_82 = arith.constant dense<0.000000e+00> : vector<8xf32>
    %194 = vector.multi_reduction <add>, %193, %cst_82 [1] : vector<8x8xf32> to vector<8xf32>
    %195 = vector.shape_cast %194 : vector<8xf32> to vector<8x1xf32>
    %196 = tpu.reciprocal %195 {approx = true} : vector<8x1xf32> -> vector<8x1xf32>
    %197 = vector.broadcast %196 : vector<8x1xf32> to vector<8x8xf32>
    %198 = arith.mulf %193, %197 : vector<8x8xf32>
    %cst_83 = arith.constant dense<0.000000e+00> : vector<8x8xf32>
    %199 = tpu.matmul %198, %186, %cst_83 {dimension_numbers = #tpu.dot_dimension_numbers<[1], [0], [0], [1], [0, 0, 1, 1], [], []>} : vector<8x8xf32>, vector<8x8xf32>, vector<8x8xf32> -> vector<8x8xf32>
    %c0_84 = arith.constant 0 : index
    %c16_85 = arith.constant 16 : index
    %200 = vector.load %arg14[%c0_84, %c16_85] : memref<8x32xf32, #tpu.memory_space<vmem>>, vector<8x8xf32>
    tpu.vector_store %arg14[%c0_84, %c16_85], %199 {strides = array<i32>} : memref<8x32xf32, #tpu.memory_space<vmem>>, vector<8x8xf32>,
    %201 = vector.extract_strided_slice %149 {offsets = [0, 24], sizes = [8, 8], strides = [1, 1]} : vector<8x96xf32> to vector<8x8xf32>
    %202 = vector.extract_strided_slice %149 {offsets = [0, 56], sizes = [8, 8], strides = [1, 1]} : vector<8x96xf32> to vector<8x8xf32>
    %203 = vector.extract_strided_slice %149 {offsets = [0, 88], sizes = [8, 8], strides = [1, 1]} : vector<8x96xf32> to vector<8x8xf32>
    %204 = tpu.transpose %202, [1, 0] : vector<8x8xf32> -> vector<8x8xf32>
    %cst_86 = arith.constant dense<0.000000e+00> : vector<8x8xf32>
    %205 = tpu.matmul %201, %204, %cst_86 {dimension_numbers = #tpu.dot_dimension_numbers<[1], [0], [0], [1], [0, 0, 1, 1], [], []>} : vector<8x8xf32>, vector<8x8xf32>, vector<8x8xf32> -> vector<8x8xf32>
    %cst_87 = arith.constant dense<0xFF800000> : vector<8xf32>
    %206 = vector.multi_reduction <maximumf>, %205, %cst_87 [1] : vector<8x8xf32> to vector<8xf32>
    %207 = vector.shape_cast %206 : vector<8xf32> to vector<8x1xf32>
    %208 = vector.broadcast %207 : vector<8x1xf32> to vector<8x8xf32>
    %209 = arith.subf %205, %208 : vector<8x8xf32>
    %210 = math.exp %209 : vector<8x8xf32>
    %cst_88 = arith.constant dense<0.000000e+00> : vector<8xf32>
    %211 = vector.multi_reduction <add>, %210, %cst_88 [1] : vector<8x8xf32> to vector<8xf32>
    %212 = vector.shape_cast %211 : vector<8xf32> to vector<8x1xf32>
    %213 = tpu.reciprocal %212 {approx = true} : vector<8x1xf32> -> vector<8x1xf32>
    %214 = vector.broadcast %213 : vector<8x1xf32> to vector<8x8xf32>
    %215 = arith.mulf %210, %214 : vector<8x8xf32>
    %cst_89 = arith.constant dense<0.000000e+00> : vector<8x8xf32>
    %216 = tpu.matmul %215, %203, %cst_89 {dimension_numbers = #tpu.dot_dimension_numbers<[1], [0], [0], [1], [0, 0, 1, 1], [], []>} : vector<8x8xf32>, vector<8x8xf32>, vector<8x8xf32> -> vector<8x8xf32>
    %c0_90 = arith.constant 0 : index
    %c24_91 = arith.constant 24 : index
    %217 = vector.load %arg14[%c0_90, %c24_91] : memref<8x32xf32, #tpu.memory_space<vmem>>, vector<8x8xf32>
    tpu.vector_store %arg14[%c0_90, %c24_91], %216 {strides = array<i32>} : memref<8x32xf32, #tpu.memory_space<vmem>>, vector<8x8xf32>,
    %c0_92 = arith.constant 0 : index
    %c0_93 = arith.constant 0 : index
    %218 = vector.load %arg14[%c0_92, %c0_93] : memref<8x32xf32, #tpu.memory_space<vmem>>, vector<8x32xf32>
    %c1_94 = arith.constant 1 : index
    %c0_95 = arith.constant 0 : index
    %c0_96 = arith.constant 0 : index
    %219 = vector.load %arg4[%c1_94, %c0_95, %c0_96] : memref<2x32x32xf32, #tpu.memory_space<vmem>>, vector<1x32x32xf32>
    %220 = vector.shape_cast %219 : vector<1x32x32xf32> to vector<32x32xf32>
    %cst_97 = arith.constant dense<0.000000e+00> : vector<8x32xf32>
    %221 = tpu.matmul %218, %220, %cst_97 {dimension_numbers = #tpu.dot_dimension_numbers<[1], [0], [0], [1], [0, 0, 1, 1], [], []>} : vector<8x32xf32>, vector<32x32xf32>, vector<8x32xf32> -> vector<8x32xf32>
    %222 = arith.addf %133, %221 : vector<8x32xf32>
    %c1_98 = arith.constant 1 : index
    %c0_99 = arith.constant 0 : index
    %223 = vector.load %arg5[%c1_98, %c0_99] : memref<2x32xf32, #tpu.memory_space<vmem>>, vector<1x32xf32>
    %224 = vector.broadcast %223 : vector<1x32xf32> to vector<8x32xf32>
    %225 = arith.addf %222, %224 : vector<8x32xf32>
    %c1_100 = arith.constant 1 : index
    %c0_101 = arith.constant 0 : index
    %226 = vector.load %arg6[%c1_100, %c0_101] : memref<2x32xf32, #tpu.memory_space<vmem>>, vector<1x32xf32>
    %227 = arith.mulf %225, %225 : vector<8x32xf32>
    %cst_102 = arith.constant dense<0.000000e+00> : vector<8xf32>
    %228 = vector.multi_reduction <add>, %227, %cst_102 [1] : vector<8x32xf32> to vector<8xf32>
    %229 = vector.shape_cast %228 : vector<8xf32> to vector<8x1xf32>
    %cst_103 = arith.constant 3.200000e+01 : f32
    %230 = vector.broadcast %cst_103 : f32 to vector<8x1xf32>
    %231 = arith.divf %229, %230 : vector<8x1xf32>
    %cst_104 = arith.constant 9.99999974E-6 : f32
    %232 = vector.broadcast %cst_104 : f32 to vector<8x1xf32>
    %233 = arith.addf %231, %232 : vector<8x1xf32>
    %234 = math.rsqrt %233 : vector<8x1xf32>
    %235 = vector.broadcast %234 : vector<8x1xf32> to vector<8x32xf32>
    %236 = arith.mulf %225, %235 : vector<8x32xf32>
    %237 = vector.broadcast %226 : vector<1x32xf32> to vector<8x32xf32>
    %238 = arith.mulf %236, %237 : vector<8x32xf32>
    %c1_105 = arith.constant 1 : index
    %c0_106 = arith.constant 0 : index
    %c0_107 = arith.constant 0 : index
    %239 = vector.load %arg7[%c1_105, %c0_106, %c0_107] : memref<2x32x128xf32, #tpu.memory_space<vmem>>, vector<1x32x128xf32>
    %240 = vector.shape_cast %239 : vector<1x32x128xf32> to vector<32x128xf32>
    %cst_108 = arith.constant dense<0.000000e+00> : vector<8x128xf32>
    %241 = tpu.matmul %238, %240, %cst_108 {dimension_numbers = #tpu.dot_dimension_numbers<[1], [0], [0], [1], [0, 0, 1, 1], [], []>} : vector<8x32xf32>, vector<32x128xf32>, vector<8x128xf32> -> vector<8x128xf32>
    %c1_109 = arith.constant 1 : index
    %c0_110 = arith.constant 0 : index
    %242 = vector.load %arg8[%c1_109, %c0_110] : memref<2x128xf32, #tpu.memory_space<vmem>>, vector<1x128xf32>
    %243 = vector.broadcast %242 : vector<1x128xf32> to vector<8x128xf32>
    %244 = arith.addf %241, %243 : vector<8x128xf32>
    %cst_111 = arith.constant 5.000000e-01 : f32
    %245 = vector.broadcast %cst_111 : f32 to vector<8x128xf32>
    %246 = arith.mulf %245, %244 : vector<8x128xf32>
    %cst_112 = arith.constant 0.636619746 : f32
    %247 = math.sqrt %cst_112 : f32
    %cst_113 = arith.constant 4.471500e-01 : f32
    %248 = vector.broadcast %cst_113 : f32 to vector<8x128xf32>
    %249 = arith.mulf %248, %244 : vector<8x128xf32>
    %250 = arith.mulf %249, %244 : vector<8x128xf32>
    %251 = arith.mulf %250, %244 : vector<8x128xf32>
    %252 = arith.addf %244, %251 : vector<8x128xf32>
    %253 = vector.broadcast %247 : f32 to vector<8x128xf32>
    %254 = arith.mulf %253, %252 : vector<8x128xf32>
    %255 = math.tanh %254 : vector<8x128xf32>
    %cst_114 = arith.constant 1.000000e+00 : f32
    %256 = vector.broadcast %cst_114 : f32 to vector<8x128xf32>
    %257 = arith.addf %256, %255 : vector<8x128xf32>
    %258 = arith.mulf %246, %257 : vector<8x128xf32>
    %c1_115 = arith.constant 1 : index
    %c0_116 = arith.constant 0 : index
    %c0_117 = arith.constant 0 : index
    %259 = vector.load %arg9[%c1_115, %c0_116, %c0_117] : memref<2x128x32xf32, #tpu.memory_space<vmem>>, vector<1x128x32xf32>
    %260 = vector.shape_cast %259 : vector<1x128x32xf32> to vector<128x32xf32>
    %cst_118 = arith.constant dense<0.000000e+00> : vector<8x32xf32>
    %261 = tpu.matmul %258, %260, %cst_118 {dimension_numbers = #tpu.dot_dimension_numbers<[1], [0], [0], [1], [0, 0, 1, 1], [], []>} : vector<8x128xf32>, vector<128x32xf32>, vector<8x32xf32> -> vector<8x32xf32>
    %262 = arith.addf %225, %261 : vector<8x32xf32>
    %c1_119 = arith.constant 1 : index
    %c0_120 = arith.constant 0 : index
    %263 = vector.load %arg10[%c1_119, %c0_120] : memref<2x32xf32, #tpu.memory_space<vmem>>, vector<1x32xf32>
    %264 = vector.broadcast %263 : vector<1x32xf32> to vector<8x32xf32>
    %265 = arith.addf %262, %264 : vector<8x32xf32>
    %c0_121 = arith.constant 0 : index
    %c0_122 = arith.constant 0 : index
    %266 = vector.load %arg11[%c0_121, %c0_122] : memref<1x32xf32, #tpu.memory_space<vmem>>, vector<1x32xf32>
    %267 = arith.mulf %265, %265 : vector<8x32xf32>
    %cst_123 = arith.constant dense<0.000000e+00> : vector<8xf32>
    %268 = vector.multi_reduction <add>, %267, %cst_123 [1] : vector<8x32xf32> to vector<8xf32>
    %269 = vector.shape_cast %268 : vector<8xf32> to vector<8x1xf32>
    %cst_124 = arith.constant 3.200000e+01 : f32
    %270 = vector.broadcast %cst_124 : f32 to vector<8x1xf32>
    %271 = arith.divf %269, %270 : vector<8x1xf32>
    %cst_125 = arith.constant 9.99999974E-6 : f32
    %272 = vector.broadcast %cst_125 : f32 to vector<8x1xf32>
    %273 = arith.addf %271, %272 : vector<8x1xf32>
    %274 = math.rsqrt %273 : vector<8x1xf32>
    %275 = vector.broadcast %274 : vector<8x1xf32> to vector<8x32xf32>
    %276 = arith.mulf %265, %275 : vector<8x32xf32>
    %277 = vector.broadcast %266 : vector<1x32xf32> to vector<8x32xf32>
    %278 = arith.mulf %276, %277 : vector<8x32xf32>
    %c0_126 = arith.constant 0 : index
    %c0_127 = arith.constant 0 : index
    %279 = vector.load %arg12[%c0_126, %c0_127] : memref<32x128xf32, #tpu.memory_space<vmem>>, vector<32x128xf32>
    %cst_128 = arith.constant dense<0.000000e+00> : vector<8x128xf32>
    %280 = tpu.matmul %278, %279, %cst_128 {dimension_numbers = #tpu.dot_dimension_numbers<[1], [0], [0], [1], [0, 0, 1, 1], [], []>} : vector<8x32xf32>, vector<32x128xf32>, vector<8x128xf32> -> vector<8x128xf32>
    %c0_129 = arith.constant 0 : index
    %c0_130 = arith.constant 0 : index
    %c0_131 = arith.constant 0 : index
    %281 = vector.load %arg13[%c0_129, %c0_130, %c0_131] : memref<1x8x128xf32, #tpu.memory_space<vmem>>, vector<1x8x128xf32>
    %282 = vector.shape_cast %281 : vector<1x8x128xf32> to vector<8x128xf32>
    %283 = vector.shape_cast %280 : vector<8x128xf32> to vector<1x8x128xf32>
    tpu.vector_store %arg13[%c0_129, %c0_130, %c0_131], %283 {strides = array<i32>} : memref<1x8x128xf32, #tpu.memory_space<vmem>>, vector<1x8x128xf32>,
    return
  }
  func.func @transform_0(%arg0: i32) -> (i32, i32, i32) {
    %c0_i32 = arith.constant 0 : i32
    %c0_i32_0 = arith.constant 0 : i32
    %c0_i32_1 = arith.constant 0 : i32
    return %arg0, %c0_i32, %c0_i32_0 : i32, i32, i32
  }
  func.func @transform_1(%arg0: i32) -> (i32, i32) {
    %c0_i32 = arith.constant 0 : i32
    %c0_i32_0 = arith.constant 0 : i32
    %c0_i32_1 = arith.constant 0 : i32
    return %c0_i32, %c0_i32_0 : i32, i32
  }
  func.func @transform_2(%arg0: i32) -> (i32, i32, i32) {
    %c0_i32 = arith.constant 0 : i32
    %c0_i32_0 = arith.constant 0 : i32
    %c0_i32_1 = arith.constant 0 : i32
    %c0_i32_2 = arith.constant 0 : i32
    return %c0_i32, %c0_i32_0, %c0_i32_1 : i32, i32, i32
  }
  func.func @transform_3(%arg0: i32) -> (i32, i32, i32) {
    %c0_i32 = arith.constant 0 : i32
    %c0_i32_0 = arith.constant 0 : i32
    %c0_i32_1 = arith.constant 0 : i32
    %c0_i32_2 = arith.constant 0 : i32
    return %c0_i32, %c0_i32_0, %c0_i32_1 : i32, i32, i32
  }
  func.func @transform_4(%arg0: i32) -> (i32, i32) {
    %c0_i32 = arith.constant 0 : i32
    %c0_i32_0 = arith.constant 0 : i32
    %c0_i32_1 = arith.constant 0 : i32
    return %c0_i32, %c0_i32_0 : i32, i32
  }
  func.func @transform_5(%arg0: i32) -> (i32, i32) {
    %c0_i32 = arith.constant 0 : i32
    %c0_i32_0 = arith.constant 0 : i32
    %c0_i32_1 = arith.constant 0 : i32
    return %c0_i32, %c0_i32_0 : i32, i32
  }
  func.func @transform_6(%arg0: i32) -> (i32, i32, i32) {
    %c0_i32 = arith.constant 0 : i32
    %c0_i32_0 = arith.constant 0 : i32
    %c0_i32_1 = arith.constant 0 : i32
    %c0_i32_2 = arith.constant 0 : i32
    return %c0_i32, %c0_i32_0, %c0_i32_1 : i32, i32, i32
  }
  func.func @transform_7(%arg0: i32) -> (i32, i32) {
    %c0_i32 = arith.constant 0 : i32
    %c0_i32_0 = arith.constant 0 : i32
    %c0_i32_1 = arith.constant 0 : i32
    return %c0_i32, %c0_i32_0 : i32, i32
  }
  func.func @transform_8(%arg0: i32) -> (i32, i32, i32) {
    %c0_i32 = arith.constant 0 : i32
    %c0_i32_0 = arith.constant 0 : i32
    %c0_i32_1 = arith.constant 0 : i32
    %c0_i32_2 = arith.constant 0 : i32
    return %c0_i32, %c0_i32_0, %c0_i32_1 : i32, i32, i32
  }
  func.func @transform_9(%arg0: i32) -> (i32, i32) {
    %c0_i32 = arith.constant 0 : i32
    %c0_i32_0 = arith.constant 0 : i32
    %c0_i32_1 = arith.constant 0 : i32
    return %c0_i32, %c0_i32_0 : i32, i32
  }
  func.func @transform_10(%arg0: i32) -> (i32, i32) {
    %c0_i32 = arith.constant 0 : i32
    %c0_i32_0 = arith.constant 0 : i32
    %c0_i32_1 = arith.constant 0 : i32
    return %c0_i32, %c0_i32_0 : i32, i32
  }
  func.func @transform_11(%arg0: i32) -> (i32, i32) {
    %c0_i32 = arith.constant 0 : i32
    %c0_i32_0 = arith.constant 0 : i32
    %c0_i32_1 = arith.constant 0 : i32
    return %c0_i32, %c0_i32_0 : i32, i32
  }
  func.func @transform_12(%arg0: i32) -> (i32, i32, i32) {
    %c0_i32 = arith.constant 0 : i32
    %c0_i32_0 = arith.constant 0 : i32
    %c0_i32_1 = arith.constant 0 : i32
    return %arg0, %c0_i32, %c0_i32_0 : i32, i32, i32
  }
}

</mosaic_0001>

<llo_original>
// kernel: tpu_custom_call.1
$region0: #{tpu_custom_call.1}
  #allocation0 [shape = 'u32[]', space=smem, size = 0x4, offset = 0x4, fixed_abs, tag = 'smem constant byte address 0x4 - core index']
  #allocation1 [shape = 'u32[72,128]{1,0:T(1,128)}', space=vmem, size = 0x9000, scoped, tag = 'internal scratch']
  #allocation2 [shape = 'f32[8,32]{1,0:T(8,128)}', space=vmem, size = 0x1000, scoped, tag = 'scratch operand']
  %s0 = inlined_call_operand.vmem [shape: f32[2,8,32], index: 0, kind: input, shape index: {}]
  %s1 = inlined_call_operand.vmem [shape: f32[2,32], index: 1, kind: input, shape index: {}]
  %s2 = inlined_call_operand.vmem [shape: f32[2,32,96], index: 2, kind: input, shape index: {}]
  %s3 = inlined_call_operand.vmem [shape: f32[2,32,32], index: 3, kind: input, shape index: {}]
  %s4 = inlined_call_operand.vmem [shape: f32[2,32], index: 4, kind: input, shape index: {}]
  %s5 = inlined_call_operand.vmem [shape: f32[2,32], index: 5, kind: input, shape index: {}]
  %s6 = inlined_call_operand.vmem [shape: f32[2,32,128], index: 6, kind: input, shape index: {}]
  %s7 = inlined_call_operand.vmem [shape: f32[2,128], index: 7, kind: input, shape index: {}]
  %s8 = inlined_call_operand.vmem [shape: f32[2,128,32], index: 8, kind: input, shape index: {}]
  %s9 = inlined_call_operand.vmem [shape: f32[2,32], index: 9, kind: input, shape index: {}]
  %s10 = inlined_call_operand.vmem [shape: f32[1,32], index: 10, kind: input, shape index: {}]
  %s11 = inlined_call_operand.vmem [shape: f32[32,128], index: 11, kind: input, shape index: {}]
  %s12 = inlined_call_operand.hbm [shape: f32[2,8,128], index: 12, kind: output, shape index: {}]
  %s13 = sld [smem:[#allocation0]]
  $region81: #{tpu_custom_call.1} parent=0
    _
  %s15 = ssub.s32 1, %s13
  %s16 = scalar_select 0, %s15, %s13
  $region1: #{tpu_custom_call.1} parent=0
    #allocation3 [shape = 'u8[8192]{0}', space=vmem, size = 0x2000, scoped, tag = 'output window, operand 0']
    #allocation4 [shape = 's32[2]{0}', space=sflag, size = 0x8, scoped, tag = 'scoped memory for tpu_custom_call.1']
    %17 = vsyncpa [#allocation4], 0
    %s18 = scalar_lea.sflag [#allocation4], 1
    %19 = vsyncpa %s18, 0
    loop: start=0, step=1, limit=4
    $region2: #{tpu_custom_call.1} parent=1 // loop_pre_header
      _
    $region3: #{tpu_custom_call.1} parent=1 // loop_header
      %s21 = sphi 0, %s25
      %p22 = scmp.ge.s32.totalorder %s21, 4
      %s31 = sphi 0, %s33
      %s34 = sphi 0, %s31
      %s35 = sphi 0, %s34
      %s51 = sphi 0, %s35
      %s55 = sphi 0, %s55
      %s57 = sphi 0, %s55
      %s58 = sphi 0, %s57
      %s72 = sphi 0, %s58
      %s76 = sphi 0, %s76
      %s78 = sphi 0, %s76
      %s79 = sphi 0, %s78
      %s93 = sphi 0, %s79
      %s97 = sphi 0, %s97
      %s99 = sphi 0, %s97
      %s100 = sphi 0, %s99
      %s114 = sphi 0, %s100
      %s118 = sphi 0, %s118
      %s120 = sphi 0, %s118
      %s121 = sphi 0, %s120
      %s135 = sphi 0, %s121
      %s139 = sphi 0, %s139
      %s141 = sphi 0, %s139
      %s142 = sphi 0, %s141
      %s156 = sphi 0, %s142
      %s160 = sphi 0, %s160
      %s162 = sphi 0, %s160
      %s163 = sphi 0, %s162
      %s177 = sphi 0, %s163
      %s181 = sphi 0, %s181
      %s183 = sphi 0, %s181
      %s184 = sphi 0, %s183
      %s198 = sphi 0, %s184
      %s202 = sphi 0, %s202
      %s204 = sphi 0, %s202
      %s205 = sphi 0, %s204
      %s219 = sphi 0, %s205
      %s223 = sphi 0, %s223
      %s225 = sphi 0, %s223
      %s226 = sphi 0, %s225
      %s240 = sphi 0, %s226
      %s244 = sphi 0, %s244
      %s246 = sphi 0, %s244
      %s247 = sphi 0, %s246
      %s261 = sphi 0, %s247
      %s265 = sphi 0, %s265
      %s267 = sphi 0, %s265
      %s268 = sphi 0, %s267
      %s282 = sphi 0, %s268
      %s288 = sphi 0, %s290
      %s291 = sphi 0, %s288
      %s292 = sphi 0, %s291
      %s308 = sphi 0, %s292
    $region4: #{tpu_custom_call.1} parent=1 // loop_header_branch
      %24 = sbr.rel (%p22) target = $region8
    $region5: #{tpu_custom_call.1} parent=1 // loop_body
      %s26 = ssub.s32 %s21, 1
      %s27 = ssub.s32 %s21, 2
      %s28 = sadd.s32 %s21, 1
      %s29 = ssub.s32 %s21, %s28
      %p30 = scmp.eq.s32.totalorder %s29, 0
      %s32 = sadd.s32 %s31, 1
      %s33 = scalar_select %p30, %s31, %s32
      %p36 = pneg %p30
      %p37 = scmp.eq.s32.totalorder %s21, 1
      %p38 = por %p36, %p37
      %p39 = scmp.ne.s32.totalorder %s31, %s34
      %p40 = scmp.eq.s32.totalorder %s21, 0
      %p41 = por %p39, %p40
      %p42 = scmp.ne.s32.totalorder %s31, %s34
      %p43 = scmp.eq.s32.totalorder %s26, 1
      %p44 = por %p42, %p43
      %p45 = scmp.ne.s32.totalorder %s34, %s35
      %p46 = scmp.eq.s32.totalorder %s26, 0
      %p47 = por %p45, %p46
      %p48 = scmp.ne.s32.totalorder %s34, %s35
      %p49 = scmp.eq.s32.totalorder %s27, 1
      %p50 = por %p48, %p49
      %p52 = scmp.ne.s32.totalorder %s35, %s51
      %p53 = scmp.eq.s32.totalorder %s27, 0
      %p54 = por %p52, %p53
      %s56 = sadd.s32 %s55, 1
      %p59 = scmp.eq.s32.totalorder %s21, 1
      %p60 = scmp.ne.s32.totalorder %s55, %s57
      %p61 = scmp.eq.s32.totalorder %s21, 0
      %p62 = por %p60, %p61
      %p63 = scmp.ne.s32.totalorder %s55, %s57
      %p64 = scmp.eq.s32.totalorder %s26, 1
      %p65 = por %p63, %p64
      %p66 = scmp.ne.s32.totalorder %s57, %s58
      %p67 = scmp.eq.s32.totalorder %s26, 0
      %p68 = por %p66, %p67
      %p69 = scmp.ne.s32.totalorder %s57, %s58
      %p70 = scmp.eq.s32.totalorder %s27, 1
      %p71 = por %p69, %p70
      %p73 = scmp.ne.s32.totalorder %s58, %s72
      %p74 = scmp.eq.s32.totalorder %s27, 0
      %p75 = por %p73, %p74
      %s77 = sadd.s32 %s76, 1
      %p80 = scmp.eq.s32.totalorder %s21, 1
      %p81 = scmp.ne.s32.totalorder %s76, %s78
      %p82 = scmp.eq.s32.totalorder %s21, 0
      %p83 = por %p81, %p82
      %p84 = scmp.ne.s32.totalorder %s76, %s78
      %p85 = scmp.eq.s32.totalorder %s26, 1
      %p86 = por %p84, %p85
      %p87 = scmp.ne.s32.totalorder %s78, %s79
      %p88 = scmp.eq.s32.totalorder %s26, 0
      %p89 = por %p87, %p88
      %p90 = scmp.ne.s32.totalorder %s78, %s79
      %p91 = scmp.eq.s32.totalorder %s27, 1
      %p92 = por %p90, %p91
      %p94 = scmp.ne.s32.totalorder %s79, %s93
      %p95 = scmp.eq.s32.totalorder %s27, 0
      %p96 = por %p94, %p95
      %s98 = sadd.s32 %s97, 1
      %p101 = scmp.eq.s32.totalorder %s21, 1
      %p102 = scmp.ne.s32.totalorder %s97, %s99
      %p103 = scmp.eq.s32.totalorder %s21, 0
      %p104 = por %p102, %p103
      %p105 = scmp.ne.s32.totalorder %s97, %s99
      %p106 = scmp.eq.s32.totalorder %s26, 1
      %p107 = por %p105, %p106
      %p108 = scmp.ne.s32.totalorder %s99, %s100
      %p109 = scmp.eq.s32.totalorder %s26, 0
      %p110 = por %p108, %p109
      %p111 = scmp.ne.s32.totalorder %s99, %s100
      %p112 = scmp.eq.s32.totalorder %s27, 1
      %p113 = por %p111, %p112
      %p115 = scmp.ne.s32.totalorder %s100, %s114
      %p116 = scmp.eq.s32.totalorder %s27, 0
      %p117 = por %p115, %p116
      %s119 = sadd.s32 %s118, 1
      %p122 = scmp.eq.s32.totalorder %s21, 1
      %p123 = scmp.ne.s32.totalorder %s118, %s120
      %p124 = scmp.eq.s32.totalorder %s21, 0
      %p125 = por %p123, %p124
      %p126 = scmp.ne.s32.totalorder %s118, %s120
      %p127 = scmp.eq.s32.totalorder %s26, 1
      %p128 = por %p126, %p127
      %p129 = scmp.ne.s32.totalorder %s120, %s121
      %p130 = scmp.eq.s32.totalorder %s26, 0
      %p131 = por %p129, %p130
      %p132 = scmp.ne.s32.totalorder %s120, %s121
      %p133 = scmp.eq.s32.totalorder %s27, 1
      %p134 = por %p132, %p133
      %p136 = scmp.ne.s32.totalorder %s121, %s135
      %p137 = scmp.eq.s32.totalorder %s27, 0
      %p138 = por %p136, %p137
      %s140 = sadd.s32 %s139, 1
      %p143 = scmp.eq.s32.totalorder %s21, 1
      %p144 = scmp.ne.s32.totalorder %s139, %s141
      %p145 = scmp.eq.s32.totalorder %s21, 0
      %p146 = por %p144, %p145
      %p147 = scmp.ne.s32.totalorder %s139, %s141
      %p148 = scmp.eq.s32.totalorder %s26, 1
      %p149 = por %p147, %p148
      %p150 = scmp.ne.s32.totalorder %s141, %s142
      %p151 = scmp.eq.s32.totalorder %s26, 0
      %p152 = por %p150, %p151
      %p153 = scmp.ne.s32.totalorder %s141, %s142
      %p154 = scmp.eq.s32.totalorder %s27, 1
      %p155 = por %p153, %p154
      %p157 = scmp.ne.s32.totalorder %s142, %s156
      %p158 = scmp.eq.s32.totalorder %s27, 0
      %p159 = por %p157, %p158
      %s161 = sadd.s32 %s160, 1
      %p164 = scmp.eq.s32.totalorder %s21, 1
      %p165 = scmp.ne.s32.totalorder %s160, %s162
      %p166 = scmp.eq.s32.totalorder %s21, 0
      %p167 = por %p165, %p166
      %p168 = scmp.ne.s32.totalorder %s160, %s162
      %p169 = scmp.eq.s32.totalorder %s26, 1
      %p170 = por %p168, %p169
      %p171 = scmp.ne.s32.totalorder %s162, %s163
      %p172 = scmp.eq.s32.totalorder %s26, 0
      %p173 = por %p171, %p172
      %p174 = scmp.ne.s32.totalorder %s162, %s163
      %p175 = scmp.eq.s32.totalorder %s27, 1
      %p176 = por %p174, %p175
      %p178 = scmp.ne.s32.totalorder %s163, %s177
      %p179 = scmp.eq.s32.totalorder %s27, 0
      %p180 = por %p178, %p179
      %s182 = sadd.s32 %s181, 1
      %p185 = scmp.eq.s32.totalorder %s21, 1
      %p186 = scmp.ne.s32.totalorder %s181, %s183
      %p187 = scmp.eq.s32.totalorder %s21, 0
      %p188 = por %p186, %p187
      %p189 = scmp.ne.s32.totalorder %s181, %s183
      %p190 = scmp.eq.s32.totalorder %s26, 1
      %p191 = por %p189, %p190
      %p192 = scmp.ne.s32.totalorder %s183, %s184
      %p193 = scmp.eq.s32.totalorder %s26, 0
      %p194 = por %p192, %p193
      %p195 = scmp.ne.s32.totalorder %s183, %s184
      %p196 = scmp.eq.s32.totalorder %s27, 1
      %p197 = por %p195, %p196
      %p199 = scmp.ne.s32.totalorder %s184, %s198
      %p200 = scmp.eq.s32.totalorder %s27, 0
      %p201 = por %p199, %p200
      %s203 = sadd.s32 %s202, 1
      %p206 = scmp.eq.s32.totalorder %s21, 1
      %p207 = scmp.ne.s32.totalorder %s202, %s204
      %p208 = scmp.eq.s32.totalorder %s21, 0
      %p209 = por %p207, %p208
      %p210 = scmp.ne.s32.totalorder %s202, %s204
      %p211 = scmp.eq.s32.totalorder %s26, 1
      %p212 = por %p210, %p211
      %p213 = scmp.ne.s32.totalorder %s204, %s205
      %p214 = scmp.eq.s32.totalorder %s26, 0
      %p215 = por %p213, %p214
      %p216 = scmp.ne.s32.totalorder %s204, %s205
      %p217 = scmp.eq.s32.totalorder %s27, 1
      %p218 = por %p216, %p217
      %p220 = scmp.ne.s32.totalorder %s205, %s219
      %p221 = scmp.eq.s32.totalorder %s27, 0
      %p222 = por %p220, %p221
      %s224 = sadd.s32 %s223, 1
      %p227 = scmp.eq.s32.totalorder %s21, 1
      %p228 = scmp.ne.s32.totalorder %s223, %s225
      %p229 = scmp.eq.s32.totalorder %s21, 0
      %p230 = por %p228, %p229
      %p231 = scmp.ne.s32.totalorder %s223, %s225
      %p232 = scmp.eq.s32.totalorder %s26, 1
      %p233 = por %p231, %p232
      %p234 = scmp.ne.s32.totalorder %s225, %s226
      %p235 = scmp.eq.s32.totalorder %s26, 0
      %p236 = por %p234, %p235
      %p237 = scmp.ne.s32.totalorder %s225, %s226
      %p238 = scmp.eq.s32.totalorder %s27, 1
      %p239 = por %p237, %p238
      %p241 = scmp.ne.s32.totalorder %s226, %s240
      %p242 = scmp.eq.s32.totalorder %s27, 0
      %p243 = por %p241, %p242
      %s245 = sadd.s32 %s244, 1
      %p248 = scmp.eq.s32.totalorder %s21, 1
      %p249 = scmp.ne.s32.totalorder %s244, %s246
      %p250 = scmp.eq.s32.totalorder %s21, 0
      %p251 = por %p249, %p250
      %p252 = scmp.ne.s32.totalorder %s244, %s246
      %p253 = scmp.eq.s32.totalorder %s26, 1
      %p254 = por %p252, %p253
      %p255 = scmp.ne.s32.totalorder %s246, %s247
      %p256 = scmp.eq.s32.totalorder %s26, 0
      %p257 = por %p255, %p256
      %p258 = scmp.ne.s32.totalorder %s246, %s247
      %p259 = scmp.eq.s32.totalorder %s27, 1
      %p260 = por %p258, %p259
      %p262 = scmp.ne.s32.totalorder %s247, %s261
      %p263 = scmp.eq.s32.totalorder %s27, 0
      %p264 = por %p262, %p263
      %s266 = sadd.s32 %s265, 1
      %p269 = scmp.eq.s32.totalorder %s21, 1
      %p270 = scmp.ne.s32.totalorder %s265, %s267
      %p271 = scmp.eq.s32.totalorder %s21, 0
      %p272 = por %p270, %p271
      %p273 = scmp.ne.s32.totalorder %s265, %s267
      %p274 = scmp.eq.s32.totalorder %s26, 1
      %p275 = por %p273, %p274
      %p276 = scmp.ne.s32.totalorder %s267, %s268
      %p277 = scmp.eq.s32.totalorder %s26, 0
      %p278 = por %p276, %p277
      %p279 = scmp.ne.s32.totalorder %s267, %s268
      %p280 = scmp.eq.s32.totalorder %s27, 1
      %p281 = por %p279, %p280
      %p283 = scmp.ne.s32.totalorder %s268, %s282
      %p284 = scmp.eq.s32.totalorder %s27, 0
      %p285 = por %p283, %p284
      %s286 = ssub.s32 %s21, %s28
      %p287 = scmp.eq.s32.totalorder %s286, 0
      %s289 = sadd.s32 %s288, 1
      %s290 = scalar_select %p287, %s288, %s289
      %p293 = pneg %p287
      %p294 = scmp.eq.s32.totalorder %s21, 1
      %p295 = por %p293, %p294
      %p296 = scmp.ne.s32.totalorder %s288, %s291
      %p297 = scmp.eq.s32.totalorder %s21, 0
      %p298 = por %p296, %p297
      %p299 = scmp.ne.s32.totalorder %s288, %s291
      %p300 = scmp.eq.s32.totalorder %s26, 1
      %p301 = por %p299, %p300
      %p302 = scmp.ne.s32.totalorder %s291, %s292
      %p303 = scmp.eq.s32.totalorder %s26, 0
      %p304 = por %p302, %p303
      %p305 = scmp.ne.s32.totalorder %s291, %s292
      %p306 = scmp.eq.s32.totalorder %s27, 1
      %p307 = por %p305, %p306
      %p309 = scmp.ne.s32.totalorder %s292, %s308
      %p310 = scmp.eq.s32.totalorder %s27, 0
      %p311 = por %p309, %p310
      %p312 = scmp.le.s32.totalorder 1, %s21
      %p313 = scmp.lt.s32.totalorder %s21, 3
      %p314 = pnand %p312, %p313
      %p315 = pneg %p314
      // Predicated region
      $region9: #{tpu_custom_call.1} parent=5 // pred_check
        _
      $region10: #{tpu_custom_call.1} parent=5 // pred_check_branch
        %317 = sbr.rel (%p314) target = $region12
      $region11: #{tpu_custom_call.1} parent=5 // pred_region
        %s318 = ssub.s32 %s21, 1
        // Predicated region
        $region13: #{tpu_custom_call.1} parent=11 // pred_check
          %p319 = pneg %p68
        $region14: #{tpu_custom_call.1} parent=11 // pred_check_branch
          %321 = sbr.rel (%p319) target = $region16
        $region15: #{tpu_custom_call.1} parent=11 // pred_region
          _
        $region16: #{tpu_custom_call.1} parent=11 // pred_fallthru
          _
        // Predicated region
        $region17: #{tpu_custom_call.1} parent=11 // pred_check
          %p322 = pneg %p89
        $region18: #{tpu_custom_call.1} parent=11 // pred_check_branch
          %324 = sbr.rel (%p322) target = $region20
        $region19: #{tpu_custom_call.1} parent=11 // pred_region
          _
        $region20: #{tpu_custom_call.1} parent=11 // pred_fallthru
          _
        // Predicated region
        $region21: #{tpu_custom_call.1} parent=11 // pred_check
          %p325 = pneg %p110
        $region22: #{tpu_custom_call.1} parent=11 // pred_check_branch
          %327 = sbr.rel (%p325) target = $region24
        $region23: #{tpu_custom_call.1} parent=11 // pred_region
          _
        $region24: #{tpu_custom_call.1} parent=11 // pred_fallthru
          _
        // Predicated region
        $region25: #{tpu_custom_call.1} parent=11 // pred_check
          %p328 = pneg %p131
        $region26: #{tpu_custom_call.1} parent=11 // pred_check_branch
          %330 = sbr.rel (%p328) target = $region28
        $region27: #{tpu_custom_call.1} parent=11 // pred_region
          _
        $region28: #{tpu_custom_call.1} parent=11 // pred_fallthru
          _
        // Predicated region
        $region29: #{tpu_custom_call.1} parent=11 // pred_check
          %p331 = pneg %p152
        $region30: #{tpu_custom_call.1} parent=11 // pred_check_branch
          %333 = sbr.rel (%p331) target = $region32
        $region31: #{tpu_custom_call.1} parent=11 // pred_region
          _
        $region32: #{tpu_custom_call.1} parent=11 // pred_fallthru
          _
        // Predicated region
        $region33: #{tpu_custom_call.1} parent=11 // pred_check
          %p334 = pneg %p173
        $region34: #{tpu_custom_call.1} parent=11 // pred_check_branch
          %336 = sbr.rel (%p334) target = $region36
        $region35: #{tpu_custom_call.1} parent=11 // pred_region
          _
        $region36: #{tpu_custom_call.1} parent=11 // pred_fallthru
          _
        // Predicated region
        $region37: #{tpu_custom_call.1} parent=11 // pred_check
          %p337 = pneg %p194
        $region38: #{tpu_custom_call.1} parent=11 // pred_check_branch
          %339 = sbr.rel (%p337) target = $region40
        $region39: #{tpu_custom_call.1} parent=11 // pred_region
          _
        $region40: #{tpu_custom_call.1} parent=11 // pred_fallthru
          _
        // Predicated region
        $region41: #{tpu_custom_call.1} parent=11 // pred_check
          %p340 = pneg %p215
        $region42: #{tpu_custom_call.1} parent=11 // pred_check_branch
          %342 = sbr.rel (%p340) target = $region44
        $region43: #{tpu_custom_call.1} parent=11 // pred_region
          _
        $region44: #{tpu_custom_call.1} parent=11 // pred_fallthru
          _
        // Predicated region
        $region45: #{tpu_custom_call.1} parent=11 // pred_check
          %p343 = pneg %p236
        $region46: #{tpu_custom_call.1} parent=11 // pred_check_branch
          %345 = sbr.rel (%p343) target = $region48
        $region47: #{tpu_custom_call.1} parent=11 // pred_region
          _
        $region48: #{tpu_custom_call.1} parent=11 // pred_fallthru
          _
        // Predicated region
        $region49: #{tpu_custom_call.1} parent=11 // pred_check
          %p346 = pneg %p257
        $region50: #{tpu_custom_call.1} parent=11 // pred_check_branch
          %348 = sbr.rel (%p346) target = $region52
        $region51: #{tpu_custom_call.1} parent=11 // pred_region
          _
        $region52: #{tpu_custom_call.1} parent=11 // pred_fallthru
          _
        // Predicated region
        $region53: #{tpu_custom_call.1} parent=11 // pred_check
          %p349 = pneg %p278
        $region54: #{tpu_custom_call.1} parent=11 // pred_check_branch
          %351 = sbr.rel (%p349) target = $region56
        $region55: #{tpu_custom_call.1} parent=11 // pred_region
          _
        $region56: #{tpu_custom_call.1} parent=11 // pred_fallthru
          _
      $region12: #{tpu_custom_call.1} parent=5 // pred_fallthru
        _
      %p352 = scmp.lt.s32.totalorder %s21, 2
      // Predicated region
      $region57: #{tpu_custom_call.1} parent=5 // pred_check
        %p353 = pneg %p352
      $region58: #{tpu_custom_call.1} parent=5 // pred_check_branch
        %355 = sbr.rel (%p353) target = $region60
      $region59: #{tpu_custom_call.1} parent=5 // pred_region
        // Predicated region
        $region61: #{tpu_custom_call.1} parent=59 // pred_check
          %p356 = pneg %p41
        $region62: #{tpu_custom_call.1} parent=59 // pred_check_branch
          %358 = sbr.rel (%p356) target = $region64
        $region63: #{tpu_custom_call.1} parent=59 // pred_region
          %p359 = scmp.lt.s32.totalorder %s21, 1
          %s360 = scalar_select %p359, %s21, 1
          %s361 = smul.addr %s360, 8
          %s362 = scalar_lea.vmem %s0, %s361
        $region64: #{tpu_custom_call.1} parent=59 // pred_fallthru
          _
      $region60: #{tpu_custom_call.1} parent=5 // pred_fallthru
        _
      %p363 = scmp.le.s32.totalorder 1, %s21
      %p364 = scmp.lt.s32.totalorder %s21, 3
      %p365 = pnand %p363, %p364
      %p366 = pneg %p365
      // Predicated region
      $region65: #{tpu_custom_call.1} parent=5 // pred_check
        _
      $region66: #{tpu_custom_call.1} parent=5 // pred_check_branch
        %368 = sbr.rel (%p365) target = $region68
      $region67: #{tpu_custom_call.1} parent=5 // pred_region
        %s369 = ssub.s32 %s21, 1
        %p370 = scmp.lt.s32.totalorder %s26, 1
        %s371 = scalar_select %p370, %s26, 1
        %s372 = smul.addr %s371, 8
        %s373 = scalar_lea.vmem %s0, %s372
        %p374 = pneg %p47
        %p375 = pneg %p44
        %p376 = pneg %p68
        %p377 = pneg %p65
        %p378 = pneg %p89
        %p379 = pneg %p86
        %p380 = pneg %p110
        %p381 = pneg %p107
        %p382 = pneg %p131
        %p383 = pneg %p128
        %p384 = pneg %p152
        %p385 = pneg %p149
        %p386 = pneg %p173
        %p387 = pneg %p170
        %p388 = pneg %p194
        %p389 = pneg %p191
        %p390 = pneg %p215
        %p391 = pneg %p212
        %p392 = pneg %p236
        %p393 = pneg %p233
        %p394 = pneg %p257
        %p395 = pneg %p254
        %p396 = pneg %p278
        %p397 = pneg %p275
        %p398 = pneg %p304
        %p399 = pneg %p301
        %s400 = sand.u32 %s291, 1
        %s401 = scalar_lea.sflag [#allocation4], %s400
        %s402 = sand.u32 %s291, 1
        %s403 = smul.addr %s402, 8
        %s404 = scalar_lea.vmem [#allocation3], %s403
        %p405 = scmp.lt.s32.totalorder %s26, 1
        %s406 = scalar_select %p405, %s26, 1
        %s407 = smul.addr %s406, 8
        %s408 = scalar_lea.vmem %s0, %s407
        %v409 = vld [vmem:[%s408] sm:$0xff]
        %v410 = vld [vmem:[%s1] sm:$0x1]
        %v411 = vmul.f32 %v409, %v409
        %vm412 = vcmask 261120
        %v413 = vsel %vm412, %v411, 0.0
        %414 = vadd.xlane.f32.xlu0 %v413
        %v415 = vpop.xlane.xlu0 %414
        %v416 = vrcp.pop 32.0
        %v417 = vmul.f32 32.0, %v416
        %v418 = vsub.f32 1.0, %v417
        %v419 = vmul.f32 %v416, %v418
        %v420 = vadd.f32 %v416, %v419
        %vm421 = vweird.f32 %v416
        %v422 = vsel %vm421, %v416, %v420
        %v423 = vmul.f32 %v415, %v422
        %v424 = vadd.f32 %v423, 1e-05
        %v425 = vrsqrt.pop %v424
        %v426 = vmul.f32 %v425, %v424
        %v427 = vmul.f32 %v426, %v425
        %v428 = vmul.f32 0.5, %v427
        %v429 = vsub.f32 1.5, %v428
        %v430 = vmul.f32 %v425, %v429
        %vm431 = vweird.f32 %v424
        %vm432 = vweird.f32 %v425
        %vm433 = vmor %vm431, %vm432
        %v434 = vsel %vm433, %v425, %v430
        %v435 = vmul.f32 %v409, %v434
        %v436 = vperm.slane %v410, 0
        %v437 = vmul.f32 %v435, %v436
        %v438 = vld [vmem:[%s2] sm:$0xff]
        %v439 = vld [vmem:[%s2 + $0x8] sm:$0xff]
        %v440 = vld [vmem:[%s2 + $0x10] sm:$0xff]
        %v441 = vld [vmem:[%s2 + $0x18] sm:$0xff]
        %v443 = vsel %vm412, %v437, 0
        %445 = vmatpush.msra.mxu0 0.0
        %446 = vmatpush.msra.mxu0 0.0
        %447 = vmatpush.msra.mxu0 0.0
        %448 = vmatpush.msra.mxu0 0.0
        %449 = vmatpush.msra.mxu0 0.0
        %450 = vmatpush.msra.mxu0 0.0
        %451 = vmatpush.msra.mxu0 0.0
        %452 = vmatpush.msra.mxu0 0.0
        %453 = vmatpush.msra.mxu0 0.0
        %454 = vmatpush.msra.mxu0 0.0
        %455 = vmatpush.msra.mxu0 0.0
        %456 = vmatpush.msra.mxu0 0.0
        %457 = vmatpush.msra.mxu0 %v441
        %458 = vmatpush.msra.mxu0 %v440
        %459 = vmatpush.msra.mxu0 %v439
        %460 = vmatpush.msra.mxu0 %v438
        %461 = vmatmul.f32.gmra.mxu0 %v443
        %v462 = vpop.f32.mrf.mxu0
        %v463 = vadd.f32 0.0, %v462
        %464 = vdwg.mxu0
        %466 = vrot.lane.b32.xlu0 %v463, 96
        %v467 = vpop.permute.xlu0 %466
        %vm468 = vcmask 64512
        %v469 = vsel %vm468, %v463, 0
        %v471 = vsel %vm468, %v467, 0
        %473 = vmatpush.xpose.msra.mxu0 0.0
        %474 = vmatpush.xpose.msra.mxu0 0.0
        %475 = vmatpush.xpose.msra.mxu0 0.0
        %476 = vmatpush.xpose.msra.mxu0 0.0
        %477 = vmatpush.xpose.msra.mxu0 0.0
        %478 = vmatpush.xpose.msra.mxu0 0.0
        %479 = vmatpush.xpose.msra.mxu0 0.0
        %480 = vmatpush.xpose.msra.mxu0 0.0
        %481 = vmatpush.xpose.msra.mxu0 0.0
        %482 = vmatpush.xpose.msra.mxu0 0.0
        %483 = vmatpush.xpose.msra.mxu0 0.0
        %484 = vmatpush.xpose.msra.mxu0 0.0
        %485 = vmatpush.xpose.msra.mxu0 0.0
        %486 = vmatpush.xpose.msra.mxu0 0.0
        %487 = vmatpush.xpose.msra.mxu0 0.0
        %488 = vmatpush.xpose.msra.mxu0 %v471
        %489 = vmatmul.f32.gmra.mxu0 %v469
        %v490 = vpop.f32.mrf.mxu0
        %v491 = vadd.f32 0.0, %v490
        %492 = vdwg.mxu0
        %v493 = vsel %vm468, %v491, -inf
        %494 = vmax.xlane.f32.xlu0 %v493
        %v495 = vpop.xlane.xlu0 %494
        %v496 = vsub.f32 %v491, %v495
        %v497 = vmul.f32 %v496, 1.442695
        %v498 = vpow.pop %v497
        %v499 = vsel %vm468, %v498, 0.0
        %500 = vadd.xlane.f32.xlu0 %v499
        %v501 = vpop.xlane.xlu0 %500
        %v502 = vrcp.pop %v501
        %v503 = vmul.f32 %v498, %v502
        %504 = vrot.lane.b32.xlu0 %v463, 64
        %v505 = vpop.permute.xlu0 %504
        %v508 = vsel %vm468, %v503, 0
        %510 = vmatpush.msra.mxu0 0.0
        %511 = vmatpush.msra.mxu0 0.0
        %512 = vmatpush.msra.mxu0 0.0
        %513 = vmatpush.msra.mxu0 0.0
        %514 = vmatpush.msra.mxu0 0.0
        %515 = vmatpush.msra.mxu0 0.0
        %516 = vmatpush.msra.mxu0 0.0
        %517 = vmatpush.msra.mxu0 0.0
        %518 = vmatpush.msra.mxu0 0.0
        %519 = vmatpush.msra.mxu0 0.0
        %520 = vmatpush.msra.mxu0 0.0
        %521 = vmatpush.msra.mxu0 0.0
        %522 = vmatpush.msra.mxu0 0.0
        %523 = vmatpush.msra.mxu0 0.0
        %524 = vmatpush.msra.mxu0 0.0
        %525 = vmatpush.msra.mxu0 %v505
        %526 = vmatmul.f32.gmra.mxu0 %v508
        %v527 = vpop.f32.mrf.mxu0
        %v528 = vadd.f32 0.0, %v527
        %529 = vdwg.mxu0
        %530 = vst.msk [vmem:[#allocation2] sm:$0xff] %vm468, %v528
        %531 = vrot.lane.b32.xlu0 %v463, 120
        %v532 = vpop.permute.xlu0 %531
        %533 = vrot.lane.b32.xlu0 %v463, 88
        %v534 = vpop.permute.xlu0 %533
        %v535 = vsel %vm468, %v532, 0
        %v537 = vsel %vm468, %v534, 0
        %539 = vmatpush.xpose.msra.mxu0 0.0
        %540 = vmatpush.xpose.msra.mxu0 0.0
        %541 = vmatpush.xpose.msra.mxu0 0.0
        %542 = vmatpush.xpose.msra.mxu0 0.0
        %543 = vmatpush.xpose.msra.mxu0 0.0
        %544 = vmatpush.xpose.msra.mxu0 0.0
        %545 = vmatpush.xpose.msra.mxu0 0.0
        %546 = vmatpush.xpose.msra.mxu0 0.0
        %547 = vmatpush.xpose.msra.mxu0 0.0
        %548 = vmatpush.xpose.msra.mxu0 0.0
        %549 = vmatpush.xpose.msra.mxu0 0.0
        %550 = vmatpush.xpose.msra.mxu0 0.0
        %551 = vmatpush.xpose.msra.mxu0 0.0
        %552 = vmatpush.xpose.msra.mxu0 0.0
        %553 = vmatpush.xpose.msra.mxu0 0.0
        %554 = vmatpush.xpose.msra.mxu0 %v537
        %555 = vmatmul.f32.gmra.mxu0 %v535
        %v556 = vpop.f32.mrf.mxu0
        %v557 = vadd.f32 0.0, %v556
        %558 = vdwg.mxu0
        %v559 = vsel %vm468, %v557, -inf
        %560 = vmax.xlane.f32.xlu0 %v559
        %v561 = vpop.xlane.xlu0 %560
        %v562 = vsub.f32 %v557, %v561
        %v563 = vmul.f32 %v562, 1.442695
        %v564 = vpow.pop %v563
        %v565 = vsel %vm468, %v564, 0.0
        %566 = vadd.xlane.f32.xlu0 %v565
        %v567 = vpop.xlane.xlu0 %566
        %v568 = vrcp.pop %v567
        %v569 = vmul.f32 %v564, %v568
        %570 = vrot.lane.b32.xlu0 %v463, 56
        %v571 = vpop.permute.xlu0 %570
        %v574 = vsel %vm468, %v569, 0
        %576 = vmatpush.msra.mxu0 0.0
        %577 = vmatpush.msra.mxu0 0.0
        %578 = vmatpush.msra.mxu0 0.0
        %579 = vmatpush.msra.mxu0 0.0
        %580 = vmatpush.msra.mxu0 0.0
        %581 = vmatpush.msra.mxu0 0.0
        %582 = vmatpush.msra.mxu0 0.0
        %583 = vmatpush.msra.mxu0 0.0
        %584 = vmatpush.msra.mxu0 0.0
        %585 = vmatpush.msra.mxu0 0.0
        %586 = vmatpush.msra.mxu0 0.0
        %587 = vmatpush.msra.mxu0 0.0
        %588 = vmatpush.msra.mxu0 0.0
        %589 = vmatpush.msra.mxu0 0.0
        %590 = vmatpush.msra.mxu0 0.0
        %591 = vmatpush.msra.mxu0 %v571
        %592 = vmatmul.f32.gmra.mxu0 %v574
        %v593 = vpop.f32.mrf.mxu0
        %v594 = vadd.f32 0.0, %v593
        %595 = vdwg.mxu0
        %597 = vrot.lane.b32.xlu0 %v594, 8
        %v598 = vpop.permute.xlu0 %597
        %vm600 = vcmask 130112
        %601 = vst.msk [vmem:[#allocation2] sm:$0xff] %vm600, %v598
        %602 = vrot.lane.b32.xlu0 %v463, 112
        %v603 = vpop.permute.xlu0 %602
        %604 = vrot.lane.b32.xlu0 %v463, 80
        %v605 = vpop.permute.xlu0 %604
        %v606 = vsel %vm468, %v603, 0
        %v608 = vsel %vm468, %v605, 0
        %610 = vmatpush.xpose.msra.mxu0 0.0
        %611 = vmatpush.xpose.msra.mxu0 0.0
        %612 = vmatpush.xpose.msra.mxu0 0.0
        %613 = vmatpush.xpose.msra.mxu0 0.0
        %614 = vmatpush.xpose.msra.mxu0 0.0
        %615 = vmatpush.xpose.msra.mxu0 0.0
        %616 = vmatpush.xpose.msra.mxu0 0.0
        %617 = vmatpush.xpose.msra.mxu0 0.0
        %618 = vmatpush.xpose.msra.mxu0 0.0
        %619 = vmatpush.xpose.msra.mxu0 0.0
        %620 = vmatpush.xpose.msra.mxu0 0.0
        %621 = vmatpush.xpose.msra.mxu0 0.0
        %622 = vmatpush.xpose.msra.mxu0 0.0
        %623 = vmatpush.xpose.msra.mxu0 0.0
        %624 = vmatpush.xpose.msra.mxu0 0.0
        %625 = vmatpush.xpose.msra.mxu0 %v608
        %626 = vmatmul.f32.gmra.mxu0 %v606
        %v627 = vpop.f32.mrf.mxu0
        %v628 = vadd.f32 0.0, %v627
        %629 = vdwg.mxu0
        %v630 = vsel %vm468, %v628, -inf
        %631 = vmax.xlane.f32.xlu0 %v630
        %v632 = vpop.xlane.xlu0 %631
        %v633 = vsub.f32 %v628, %v632
        %v634 = vmul.f32 %v633, 1.442695
        %v635 = vpow.pop %v634
        %v636 = vsel %vm468, %v635, 0.0
        %637 = vadd.xlane.f32.xlu0 %v636
        %v638 = vpop.xlane.xlu0 %637
        %v639 = vrcp.pop %v638
        %v640 = vmul.f32 %v635, %v639
        %641 = vrot.lane.b32.xlu0 %v463, 48
        %v642 = vpop.permute.xlu0 %641
        %v645 = vsel %vm468, %v640, 0
        %647 = vmatpush.msra.mxu0 0.0
        %648 = vmatpush.msra.mxu0 0.0
        %649 = vmatpush.msra.mxu0 0.0
        %650 = vmatpush.msra.mxu0 0.0
        %651 = vmatpush.msra.mxu0 0.0
        %652 = vmatpush.msra.mxu0 0.0
        %653 = vmatpush.msra.mxu0 0.0
        %654 = vmatpush.msra.mxu0 0.0
        %655 = vmatpush.msra.mxu0 0.0
        %656 = vmatpush.msra.mxu0 0.0
        %657 = vmatpush.msra.mxu0 0.0
        %658 = vmatpush.msra.mxu0 0.0
        %659 = vmatpush.msra.mxu0 0.0
        %660 = vmatpush.msra.mxu0 0.0
        %661 = vmatpush.msra.mxu0 0.0
        %662 = vmatpush.msra.mxu0 %v642
        %663 = vmatmul.f32.gmra.mxu0 %v645
        %v664 = vpop.f32.mrf.mxu0
        %v665 = vadd.f32 0.0, %v664
        %666 = vdwg.mxu0
        %668 = vrot.lane.b32.xlu0 %v665, 16
        %v669 = vpop.permute.xlu0 %668
        %vm671 = vcmask 195712
        %672 = vst.msk [vmem:[#allocation2] sm:$0xff] %vm671, %v669
        %673 = vrot.lane.b32.xlu0 %v463, 104
        %v674 = vpop.permute.xlu0 %673
        %675 = vrot.lane.b32.xlu0 %v463, 72
        %v676 = vpop.permute.xlu0 %675
        %v677 = vsel %vm468, %v674, 0
        %v679 = vsel %vm468, %v676, 0
        %681 = vmatpush.xpose.msra.mxu0 0.0
        %682 = vmatpush.xpose.msra.mxu0 0.0
        %683 = vmatpush.xpose.msra.mxu0 0.0
        %684 = vmatpush.xpose.msra.mxu0 0.0
        %685 = vmatpush.xpose.msra.mxu0 0.0
        %686 = vmatpush.xpose.msra.mxu0 0.0
        %687 = vmatpush.xpose.msra.mxu0 0.0
        %688 = vmatpush.xpose.msra.mxu0 0.0
        %689 = vmatpush.xpose.msra.mxu0 0.0
        %690 = vmatpush.xpose.msra.mxu0 0.0
        %691 = vmatpush.xpose.msra.mxu0 0.0
        %692 = vmatpush.xpose.msra.mxu0 0.0
        %693 = vmatpush.xpose.msra.mxu0 0.0
        %694 = vmatpush.xpose.msra.mxu0 0.0
        %695 = vmatpush.xpose.msra.mxu0 0.0
        %696 = vmatpush.xpose.msra.mxu0 %v679
        %697 = vmatmul.f32.gmra.mxu0 %v677
        %v698 = vpop.f32.mrf.mxu0
        %v699 = vadd.f32 0.0, %v698
        %700 = vdwg.mxu0
        %v701 = vsel %vm468, %v699, -inf
        %702 = vmax.xlane.f32.xlu0 %v701
        %v703 = vpop.xlane.xlu0 %702
        %v704 = vsub.f32 %v699, %v703
        %v705 = vmul.f32 %v704, 1.442695
        %v706 = vpow.pop %v705
        %v707 = vsel %vm468, %v706, 0.0
        %708 = vadd.xlane.f32.xlu0 %v707
        %v709 = vpop.xlane.xlu0 %708
        %v710 = vrcp.pop %v709
        %v711 = vmul.f32 %v706, %v710
        %712 = vrot.lane.b32.xlu0 %v463, 40
        %v713 = vpop.permute.xlu0 %712
        %v716 = vsel %vm468, %v711, 0
        %718 = vmatpush.msra.mxu0 0.0
        %719 = vmatpush.msra.mxu0 0.0
        %720 = vmatpush.msra.mxu0 0.0
        %721 = vmatpush.msra.mxu0 0.0
        %722 = vmatpush.msra.mxu0 0.0
        %723 = vmatpush.msra.mxu0 0.0
        %724 = vmatpush.msra.mxu0 0.0
        %725 = vmatpush.msra.mxu0 0.0
        %726 = vmatpush.msra.mxu0 0.0
        %727 = vmatpush.msra.mxu0 0.0
        %728 = vmatpush.msra.mxu0 0.0
        %729 = vmatpush.msra.mxu0 0.0
        %730 = vmatpush.msra.mxu0 0.0
        %731 = vmatpush.msra.mxu0 0.0
        %732 = vmatpush.msra.mxu0 0.0
        %733 = vmatpush.msra.mxu0 %v713
        %734 = vmatmul.f32.gmra.mxu0 %v716
        %v735 = vpop.f32.mrf.mxu0
        %v736 = vadd.f32 0.0, %v735
        %737 = vdwg.mxu0
        %739 = vrot.lane.b32.xlu0 %v736, 24
        %v740 = vpop.permute.xlu0 %739
        %vm742 = vcmask 261312
        %743 = vst.msk [vmem:[#allocation2] sm:$0xff] %vm742, %v740
        %v744 = vld [vmem:[#allocation2] sm:$0xff]
        %v745 = vld [vmem:[%s3] sm:$0xff]
        %v746 = vld [vmem:[%s3 + $0x8] sm:$0xff]
        %v747 = vld [vmem:[%s3 + $0x10] sm:$0xff]
        %v748 = vld [vmem:[%s3 + $0x18] sm:$0xff]
        %v750 = vsel %vm412, %v744, 0
        %752 = vmatpush.msra.mxu0 0.0
        %753 = vmatpush.msra.mxu0 0.0
        %754 = vmatpush.msra.mxu0 0.0
        %755 = vmatpush.msra.mxu0 0.0
        %756 = vmatpush.msra.mxu0 0.0
        %757 = vmatpush.msra.mxu0 0.0
        %758 = vmatpush.msra.mxu0 0.0
        %759 = vmatpush.msra.mxu0 0.0
        %760 = vmatpush.msra.mxu0 0.0
        %761 = vmatpush.msra.mxu0 0.0
        %762 = vmatpush.msra.mxu0 0.0
        %763 = vmatpush.msra.mxu0 0.0
        %764 = vmatpush.msra.mxu0 %v748
        %765 = vmatpush.msra.mxu0 %v747
        %766 = vmatpush.msra.mxu0 %v746
        %767 = vmatpush.msra.mxu0 %v745
        %768 = vmatmul.f32.gmra.mxu0 %v750
        %v769 = vpop.f32.mrf.mxu0
        %v770 = vadd.f32 0.0, %v769
        %771 = vdwg.mxu0
        %v772 = vadd.f32 %v409, %v770
        %v773 = vld [vmem:[%s4] sm:$0x1]
        %v774 = vperm.slane %v773, 0
        %v775 = vadd.f32 %v772, %v774
        %v776 = vld [vmem:[%s5] sm:$0x1]
        %v777 = vmul.f32 %v775, %v775
        %v778 = vsel %vm412, %v777, 0.0
        %779 = vadd.xlane.f32.xlu0 %v778
        %v780 = vpop.xlane.xlu0 %779
        %v781 = vmul.f32 %v780, %v422
        %v782 = vadd.f32 %v781, 1e-05
        %v783 = vrsqrt.pop %v782
        %v784 = vmul.f32 %v783, %v782
        %v785 = vmul.f32 %v784, %v783
        %v786 = vmul.f32 0.5, %v785
        %v787 = vsub.f32 1.5, %v786
        %v788 = vmul.f32 %v783, %v787
        %vm789 = vweird.f32 %v782
        %vm790 = vweird.f32 %v783
        %vm791 = vmor %vm789, %vm790
        %v792 = vsel %vm791, %v783, %v788
        %v793 = vmul.f32 %v775, %v792
        %v794 = vperm.slane %v776, 0
        %v795 = vmul.f32 %v793, %v794
        %v796 = vld [vmem:[%s6] sm:$0xff]
        %v797 = vld [vmem:[%s6 + $0x8] sm:$0xff]
        %v798 = vld [vmem:[%s6 + $0x10] sm:$0xff]
        %v799 = vld [vmem:[%s6 + $0x18] sm:$0xff]
        %v800 = vld [vmem:[%s7] sm:$0x1]
        %v801 = vperm.slane %v800, 0
        %v803 = vsel %vm412, %v795, 0
        %805 = vmatpush.msra.mxu0 0.0
        %806 = vmatpush.msra.mxu0 0.0
        %807 = vmatpush.msra.mxu0 0.0
        %808 = vmatpush.msra.mxu0 0.0
        %809 = vmatpush.msra.mxu0 0.0
        %810 = vmatpush.msra.mxu0 0.0
        %811 = vmatpush.msra.mxu0 0.0
        %812 = vmatpush.msra.mxu0 0.0
        %813 = vmatpush.msra.mxu0 0.0
        %814 = vmatpush.msra.mxu0 0.0
        %815 = vmatpush.msra.mxu0 0.0
        %816 = vmatpush.msra.mxu0 0.0
        %817 = vmatpush.msra.mxu0 %v799
        %818 = vmatpush.msra.mxu0 %v798
        %819 = vmatpush.msra.mxu0 %v797
        %820 = vmatpush.msra.mxu0 %v796
        %821 = vmatmul.f32.gmra.mxu0 %v803
        %v822 = vpop.f32.mrf.mxu0
        %v823 = vadd.f32 %v801, %v822
        %824 = vdwg.mxu0
        %v825 = vmul.f32 %v823, 0.5
        %v826 = vmul.f32 %v823, 0.44715
        %v827 = vmul.f32 %v826, %v823
        %v828 = vmul.f32 %v827, %v823
        %v829 = vadd.f32 %v823, %v828
        %v830 = vmul.f32 %v829, 0.7978845
        %v831 = vtanh.pop %v830
        %v832 = vadd.f32 %v831, 1.0
        %v833 = vmul.f32 %v825, %v832
        %v834 = vld [vmem:[%s8] sm:$0xff]
        %v835 = vld [vmem:[%s8 + $0x8] sm:$0xff]
        %v836 = vld [vmem:[%s8 + $0x10] sm:$0xff]
        %v837 = vld [vmem:[%s8 + $0x18] sm:$0xff]
        %v838 = vld [vmem:[%s8 + $0x20] sm:$0xff]
        %v839 = vld [vmem:[%s8 + $0x28] sm:$0xff]
        %v840 = vld [vmem:[%s8 + $0x30] sm:$0xff]
        %v841 = vld [vmem:[%s8 + $0x38] sm:$0xff]
        %v842 = vld [vmem:[%s8 + $0x40] sm:$0xff]
        %v843 = vld [vmem:[%s8 + $0x48] sm:$0xff]
        %v844 = vld [vmem:[%s8 + $0x50] sm:$0xff]
        %v845 = vld [vmem:[%s8 + $0x58] sm:$0xff]
        %v846 = vld [vmem:[%s8 + $0x60] sm:$0xff]
        %v847 = vld [vmem:[%s8 + $0x68] sm:$0xff]
        %v848 = vld [vmem:[%s8 + $0x70] sm:$0xff]
        %v849 = vld [vmem:[%s8 + $0x78] sm:$0xff]
        %850 = vmatpush.msra.mxu0 %v849
        %851 = vmatpush.msra.mxu0 %v848
        %852 = vmatpush.msra.mxu0 %v847
        %853 = vmatpush.msra.mxu0 %v846
        %854 = vmatpush.msra.mxu0 %v845
        %855 = vmatpush.msra.mxu0 %v844
        %856 = vmatpush.msra.mxu0 %v843
        %857 = vmatpush.msra.mxu0 %v842
        %858 = vmatpush.msra.mxu0 %v841
        %859 = vmatpush.msra.mxu0 %v840
        %860 = vmatpush.msra.mxu0 %v839
        %861 = vmatpush.msra.mxu0 %v838
        %862 = vmatpush.msra.mxu0 %v837
        %863 = vmatpush.msra.mxu0 %v836
        %864 = vmatpush.msra.mxu0 %v835
        %865 = vmatpush.msra.mxu0 %v834
        %866 = vmatmul.f32.gmra.mxu0 %v833
        %v867 = vpop.f32.mrf.mxu0
        %v868 = vadd.f32 0.0, %v867
        %869 = vdwg.mxu0
        %v870 = vadd.f32 %v775, %v868
        %v871 = vld [vmem:[%s9] sm:$0x1]
        %v872 = vperm.slane %v871, 0
        %v873 = vadd.f32 %v870, %v872
        %v874 = vld [vmem:[%s1 + $0x1] sm:$0x1]
        %v875 = vmul.f32 %v873, %v873
        %v876 = vsel %vm412, %v875, 0.0
        %877 = vadd.xlane.f32.xlu0 %v876
        %v878 = vpop.xlane.xlu0 %877
        %v879 = vmul.f32 %v878, %v422
        %v880 = vadd.f32 %v879, 1e-05
        %v881 = vrsqrt.pop %v880
        %v882 = vmul.f32 %v881, %v880
        %v883 = vmul.f32 %v882, %v881
        %v884 = vmul.f32 0.5, %v883
        %v885 = vsub.f32 1.5, %v884
        %v886 = vmul.f32 %v881, %v885
        %vm887 = vweird.f32 %v880
        %vm888 = vweird.f32 %v881
        %vm889 = vmor %vm887, %vm888
        %v890 = vsel %vm889, %v881, %v886
        %v891 = vmul.f32 %v873, %v890
        %v892 = vperm.slane %v874, 0
        %v893 = vmul.f32 %v891, %v892
        %s894 = scalar_lea.vmem %s2, 32
        %v895 = vld [vmem:[%s894] sm:$0xff]
        %v896 = vld [vmem:[%s894 + $0x8] sm:$0xff]
        %v897 = vld [vmem:[%s894 + $0x10] sm:$0xff]
        %v898 = vld [vmem:[%s894 + $0x18] sm:$0xff]
        %v900 = vsel %vm412, %v893, 0
        %902 = vmatpush.msra.mxu0 0.0
        %903 = vmatpush.msra.mxu0 0.0
        %904 = vmatpush.msra.mxu0 0.0
        %905 = vmatpush.msra.mxu0 0.0
        %906 = vmatpush.msra.mxu0 0.0
        %907 = vmatpush.msra.mxu0 0.0
        %908 = vmatpush.msra.mxu0 0.0
        %909 = vmatpush.msra.mxu0 0.0
        %910 = vmatpush.msra.mxu0 0.0
        %911 = vmatpush.msra.mxu0 0.0
        %912 = vmatpush.msra.mxu0 0.0
        %913 = vmatpush.msra.mxu0 0.0
        %914 = vmatpush.msra.mxu0 %v898
        %915 = vmatpush.msra.mxu0 %v897
        %916 = vmatpush.msra.mxu0 %v896
        %917 = vmatpush.msra.mxu0 %v895
        %918 = vmatmul.f32.gmra.mxu0 %v900
        %v919 = vpop.f32.mrf.mxu0
        %v920 = vadd.f32 0.0, %v919
        %921 = vdwg.mxu0
        %923 = vrot.lane.b32.xlu0 %v920, 96
        %v924 = vpop.permute.xlu0 %923
        %v925 = vsel %vm468, %v920, 0
        %v927 = vsel %vm468, %v924, 0
        %929 = vmatpush.xpose.msra.mxu0 0.0
        %930 = vmatpush.xpose.msra.mxu0 0.0
        %931 = vmatpush.xpose.msra.mxu0 0.0
        %932 = vmatpush.xpose.msra.mxu0 0.0
        %933 = vmatpush.xpose.msra.mxu0 0.0
        %934 = vmatpush.xpose.msra.mxu0 0.0
        %935 = vmatpush.xpose.msra.mxu0 0.0
        %936 = vmatpush.xpose.msra.mxu0 0.0
        %937 = vmatpush.xpose.msra.mxu0 0.0
        %938 = vmatpush.xpose.msra.mxu0 0.0
        %939 = vmatpush.xpose.msra.mxu0 0.0
        %940 = vmatpush.xpose.msra.mxu0 0.0
        %941 = vmatpush.xpose.msra.mxu0 0.0
        %942 = vmatpush.xpose.msra.mxu0 0.0
        %943 = vmatpush.xpose.msra.mxu0 0.0
        %944 = vmatpush.xpose.msra.mxu0 %v927
        %945 = vmatmul.f32.gmra.mxu0 %v925
        %v946 = vpop.f32.mrf.mxu0
        %v947 = vadd.f32 0.0, %v946
        %948 = vdwg.mxu0
        %v949 = vsel %vm468, %v947, -inf
        %950 = vmax.xlane.f32.xlu0 %v949
        %v951 = vpop.xlane.xlu0 %950
        %v952 = vsub.f32 %v947, %v951
        %v953 = vmul.f32 %v952, 1.442695
        %v954 = vpow.pop %v953
        %v955 = vsel %vm468, %v954, 0.0
        %956 = vadd.xlane.f32.xlu0 %v955
        %v957 = vpop.xlane.xlu0 %956
        %v958 = vrcp.pop %v957
        %v959 = vmul.f32 %v954, %v958
        %960 = vrot.lane.b32.xlu0 %v920, 64
        %v961 = vpop.permute.xlu0 %960
        %v964 = vsel %vm468, %v959, 0
        %966 = vmatpush.msra.mxu0 0.0
        %967 = vmatpush.msra.mxu0 0.0
        %968 = vmatpush.msra.mxu0 0.0
        %969 = vmatpush.msra.mxu0 0.0
        %970 = vmatpush.msra.mxu0 0.0
        %971 = vmatpush.msra.mxu0 0.0
        %972 = vmatpush.msra.mxu0 0.0
        %973 = vmatpush.msra.mxu0 0.0
        %974 = vmatpush.msra.mxu0 0.0
        %975 = vmatpush.msra.mxu0 0.0
        %976 = vmatpush.msra.mxu0 0.0
        %977 = vmatpush.msra.mxu0 0.0
        %978 = vmatpush.msra.mxu0 0.0
        %979 = vmatpush.msra.mxu0 0.0
        %980 = vmatpush.msra.mxu0 0.0
        %981 = vmatpush.msra.mxu0 %v961
        %982 = vmatmul.f32.gmra.mxu0 %v964
        %v983 = vpop.f32.mrf.mxu0
        %v984 = vadd.f32 0.0, %v983
        %985 = vdwg.mxu0
        %986 = vst.msk [vmem:[#allocation2] sm:$0xff] %vm468, %v984
        %987 = vrot.lane.b32.xlu0 %v920, 120
        %v988 = vpop.permute.xlu0 %987
        %989 = vrot.lane.b32.xlu0 %v920, 88
        %v990 = vpop.permute.xlu0 %989
        %v991 = vsel %vm468, %v988, 0
        %v993 = vsel %vm468, %v990, 0
        %995 = vmatpush.xpose.msra.mxu0 0.0
        %996 = vmatpush.xpose.msra.mxu0 0.0
        %997 = vmatpush.xpose.msra.mxu0 0.0
        %998 = vmatpush.xpose.msra.mxu0 0.0
        %999 = vmatpush.xpose.msra.mxu0 0.0
        %1000 = vmatpush.xpose.msra.mxu0 0.0
        %1001 = vmatpush.xpose.msra.mxu0 0.0
        %1002 = vmatpush.xpose.msra.mxu0 0.0
        %1003 = vmatpush.xpose.msra.mxu0 0.0
        %1004 = vmatpush.xpose.msra.mxu0 0.0
        %1005 = vmatpush.xpose.msra.mxu0 0.0
        %1006 = vmatpush.xpose.msra.mxu0 0.0
        %1007 = vmatpush.xpose.msra.mxu0 0.0
        %1008 = vmatpush.xpose.msra.mxu0 0.0
        %1009 = vmatpush.xpose.msra.mxu0 0.0
        %1010 = vmatpush.xpose.msra.mxu0 %v993
        %1011 = vmatmul.f32.gmra.mxu0 %v991
        %v1012 = vpop.f32.mrf.mxu0
        %v1013 = vadd.f32 0.0, %v1012
        %1014 = vdwg.mxu0
        %v1015 = vsel %vm468, %v1013, -inf
        %1016 = vmax.xlane.f32.xlu0 %v1015
        %v1017 = vpop.xlane.xlu0 %1016
        %v1018 = vsub.f32 %v1013, %v1017
        %v1019 = vmul.f32 %v1018, 1.442695
        %v1020 = vpow.pop %v1019
        %v1021 = vsel %vm468, %v1020, 0.0
        %1022 = vadd.xlane.f32.xlu0 %v1021
        %v1023 = vpop.xlane.xlu0 %1022
        %v1024 = vrcp.pop %v1023
        %v1025 = vmul.f32 %v1020, %v1024
        %1026 = vrot.lane.b32.xlu0 %v920, 56
        %v1027 = vpop.permute.xlu0 %1026
        %v1030 = vsel %vm468, %v1025, 0
        %1032 = vmatpush.msra.mxu0 0.0
        %1033 = vmatpush.msra.mxu0 0.0
        %1034 = vmatpush.msra.mxu0 0.0
        %1035 = vmatpush.msra.mxu0 0.0
        %1036 = vmatpush.msra.mxu0 0.0
        %1037 = vmatpush.msra.mxu0 0.0
        %1038 = vmatpush.msra.mxu0 0.0
        %1039 = vmatpush.msra.mxu0 0.0
        %1040 = vmatpush.msra.mxu0 0.0
        %1041 = vmatpush.msra.mxu0 0.0
        %1042 = vmatpush.msra.mxu0 0.0
        %1043 = vmatpush.msra.mxu0 0.0
        %1044 = vmatpush.msra.mxu0 0.0
        %1045 = vmatpush.msra.mxu0 0.0
        %1046 = vmatpush.msra.mxu0 0.0
        %1047 = vmatpush.msra.mxu0 %v1027
        %1048 = vmatmul.f32.gmra.mxu0 %v1030
        %v1049 = vpop.f32.mrf.mxu0
        %v1050 = vadd.f32 0.0, %v1049
        %1051 = vdwg.mxu0
        %1053 = vrot.lane.b32.xlu0 %v1050, 8
        %v1054 = vpop.permute.xlu0 %1053
        %1056 = vst.msk [vmem:[#allocation2] sm:$0xff] %vm600, %v1054
        %1057 = vrot.lane.b32.xlu0 %v920, 112
        %v1058 = vpop.permute.xlu0 %1057
        %1059 = vrot.lane.b32.xlu0 %v920, 80
        %v1060 = vpop.permute.xlu0 %1059
        %v1061 = vsel %vm468, %v1058, 0
        %v1063 = vsel %vm468, %v1060, 0
        %1065 = vmatpush.xpose.msra.mxu0 0.0
        %1066 = vmatpush.xpose.msra.mxu0 0.0
        %1067 = vmatpush.xpose.msra.mxu0 0.0
        %1068 = vmatpush.xpose.msra.mxu0 0.0
        %1069 = vmatpush.xpose.msra.mxu0 0.0
        %1070 = vmatpush.xpose.msra.mxu0 0.0
        %1071 = vmatpush.xpose.msra.mxu0 0.0
        %1072 = vmatpush.xpose.msra.mxu0 0.0
        %1073 = vmatpush.xpose.msra.mxu0 0.0
        %1074 = vmatpush.xpose.msra.mxu0 0.0
        %1075 = vmatpush.xpose.msra.mxu0 0.0
        %1076 = vmatpush.xpose.msra.mxu0 0.0
        %1077 = vmatpush.xpose.msra.mxu0 0.0
        %1078 = vmatpush.xpose.msra.mxu0 0.0
        %1079 = vmatpush.xpose.msra.mxu0 0.0
        %1080 = vmatpush.xpose.msra.mxu0 %v1063
        %1081 = vmatmul.f32.gmra.mxu0 %v1061
        %v1082 = vpop.f32.mrf.mxu0
        %v1083 = vadd.f32 0.0, %v1082
        %1084 = vdwg.mxu0
        %v1085 = vsel %vm468, %v1083, -inf
        %1086 = vmax.xlane.f32.xlu0 %v1085
        %v1087 = vpop.xlane.xlu0 %1086
        %v1088 = vsub.f32 %v1083, %v1087
        %v1089 = vmul.f32 %v1088, 1.442695
        %v1090 = vpow.pop %v1089
        %v1091 = vsel %vm468, %v1090, 0.0
        %1092 = vadd.xlane.f32.xlu0 %v1091
        %v1093 = vpop.xlane.xlu0 %1092
        %v1094 = vrcp.pop %v1093
        %v1095 = vmul.f32 %v1090, %v1094
        %1096 = vrot.lane.b32.xlu0 %v920, 48
        %v1097 = vpop.permute.xlu0 %1096
        %v1100 = vsel %vm468, %v1095, 0
        %1102 = vmatpush.msra.mxu0 0.0
        %1103 = vmatpush.msra.mxu0 0.0
        %1104 = vmatpush.msra.mxu0 0.0
        %1105 = vmatpush.msra.mxu0 0.0
        %1106 = vmatpush.msra.mxu0 0.0
        %1107 = vmatpush.msra.mxu0 0.0
        %1108 = vmatpush.msra.mxu0 0.0
        %1109 = vmatpush.msra.mxu0 0.0
        %1110 = vmatpush.msra.mxu0 0.0
        %1111 = vmatpush.msra.mxu0 0.0
        %1112 = vmatpush.msra.mxu0 0.0
        %1113 = vmatpush.msra.mxu0 0.0
        %1114 = vmatpush.msra.mxu0 0.0
        %1115 = vmatpush.msra.mxu0 0.0
        %1116 = vmatpush.msra.mxu0 0.0
        %1117 = vmatpush.msra.mxu0 %v1097
        %1118 = vmatmul.f32.gmra.mxu0 %v1100
        %v1119 = vpop.f32.mrf.mxu0
        %v1120 = vadd.f32 0.0, %v1119
        %1121 = vdwg.mxu0
        %1123 = vrot.lane.b32.xlu0 %v1120, 16
        %v1124 = vpop.permute.xlu0 %1123
        %1126 = vst.msk [vmem:[#allocation2] sm:$0xff] %vm671, %v1124
        %1127 = vrot.lane.b32.xlu0 %v920, 104
        %v1128 = vpop.permute.xlu0 %1127
        %1129 = vrot.lane.b32.xlu0 %v920, 72
        %v1130 = vpop.permute.xlu0 %1129
        %v1131 = vsel %vm468, %v1128, 0
        %v1133 = vsel %vm468, %v1130, 0
        %1135 = vmatpush.xpose.msra.mxu0 0.0
        %1136 = vmatpush.xpose.msra.mxu0 0.0
        %1137 = vmatpush.xpose.msra.mxu0 0.0
        %1138 = vmatpush.xpose.msra.mxu0 0.0
        %1139 = vmatpush.xpose.msra.mxu0 0.0
        %1140 = vmatpush.xpose.msra.mxu0 0.0
        %1141 = vmatpush.xpose.msra.mxu0 0.0
        %1142 = vmatpush.xpose.msra.mxu0 0.0
        %1143 = vmatpush.xpose.msra.mxu0 0.0
        %1144 = vmatpush.xpose.msra.mxu0 0.0
        %1145 = vmatpush.xpose.msra.mxu0 0.0
        %1146 = vmatpush.xpose.msra.mxu0 0.0
        %1147 = vmatpush.xpose.msra.mxu0 0.0
        %1148 = vmatpush.xpose.msra.mxu0 0.0
        %1149 = vmatpush.xpose.msra.mxu0 0.0
        %1150 = vmatpush.xpose.msra.mxu0 %v1133
        %1151 = vmatmul.f32.gmra.mxu0 %v1131
        %v1152 = vpop.f32.mrf.mxu0
        %v1153 = vadd.f32 0.0, %v1152
        %1154 = vdwg.mxu0
        %v1155 = vsel %vm468, %v1153, -inf
        %1156 = vmax.xlane.f32.xlu0 %v1155
        %v1157 = vpop.xlane.xlu0 %1156
        %v1158 = vsub.f32 %v1153, %v1157
        %v1159 = vmul.f32 %v1158, 1.442695
        %v1160 = vpow.pop %v1159
        %v1161 = vsel %vm468, %v1160, 0.0
        %1162 = vadd.xlane.f32.xlu0 %v1161
        %v1163 = vpop.xlane.xlu0 %1162
        %v1164 = vrcp.pop %v1163
        %v1165 = vmul.f32 %v1160, %v1164
        %1166 = vrot.lane.b32.xlu0 %v920, 40
        %v1167 = vpop.permute.xlu0 %1166
        %v1170 = vsel %vm468, %v1165, 0
        %1172 = vmatpush.msra.mxu0 0.0
        %1173 = vmatpush.msra.mxu0 0.0
        %1174 = vmatpush.msra.mxu0 0.0
        %1175 = vmatpush.msra.mxu0 0.0
        %1176 = vmatpush.msra.mxu0 0.0
        %1177 = vmatpush.msra.mxu0 0.0
        %1178 = vmatpush.msra.mxu0 0.0
        %1179 = vmatpush.msra.mxu0 0.0
        %1180 = vmatpush.msra.mxu0 0.0
        %1181 = vmatpush.msra.mxu0 0.0
        %1182 = vmatpush.msra.mxu0 0.0
        %1183 = vmatpush.msra.mxu0 0.0
        %1184 = vmatpush.msra.mxu0 0.0
        %1185 = vmatpush.msra.mxu0 0.0
        %1186 = vmatpush.msra.mxu0 0.0
        %1187 = vmatpush.msra.mxu0 %v1167
        %1188 = vmatmul.f32.gmra.mxu0 %v1170
        %v1189 = vpop.f32.mrf.mxu0
        %v1190 = vadd.f32 0.0, %v1189
        %1191 = vdwg.mxu0
        %1193 = vrot.lane.b32.xlu0 %v1190, 24
        %v1194 = vpop.permute.xlu0 %1193
        %1196 = vst.msk [vmem:[#allocation2] sm:$0xff] %vm742, %v1194
        %v1197 = vld [vmem:[#allocation2] sm:$0xff]
        %s1198 = scalar_lea.vmem %s3, 32
        %v1199 = vld [vmem:[%s1198] sm:$0xff]
        %v1200 = vld [vmem:[%s1198 + $0x8] sm:$0xff]
        %v1201 = vld [vmem:[%s1198 + $0x10] sm:$0xff]
        %v1202 = vld [vmem:[%s1198 + $0x18] sm:$0xff]
        %v1204 = vsel %vm412, %v1197, 0
        %1206 = vmatpush.msra.mxu0 0.0
        %1207 = vmatpush.msra.mxu0 0.0
        %1208 = vmatpush.msra.mxu0 0.0
        %1209 = vmatpush.msra.mxu0 0.0
        %1210 = vmatpush.msra.mxu0 0.0
        %1211 = vmatpush.msra.mxu0 0.0
        %1212 = vmatpush.msra.mxu0 0.0
        %1213 = vmatpush.msra.mxu0 0.0
        %1214 = vmatpush.msra.mxu0 0.0
        %1215 = vmatpush.msra.mxu0 0.0
        %1216 = vmatpush.msra.mxu0 0.0
        %1217 = vmatpush.msra.mxu0 0.0
        %1218 = vmatpush.msra.mxu0 %v1202
        %1219 = vmatpush.msra.mxu0 %v1201
        %1220 = vmatpush.msra.mxu0 %v1200
        %1221 = vmatpush.msra.mxu0 %v1199
        %1222 = vmatmul.f32.gmra.mxu0 %v1204
        %v1223 = vpop.f32.mrf.mxu0
        %v1224 = vadd.f32 0.0, %v1223
        %1225 = vdwg.mxu0
        %v1226 = vadd.f32 %v873, %v1224
        %v1227 = vld [vmem:[%s4 + $0x1] sm:$0x1]
        %v1228 = vperm.slane %v1227, 0
        %v1229 = vadd.f32 %v1226, %v1228
        %v1230 = vld [vmem:[%s5 + $0x1] sm:$0x1]
        %v1231 = vmul.f32 %v1229, %v1229
        %v1232 = vsel %vm412, %v1231, 0.0
        %1233 = vadd.xlane.f32.xlu0 %v1232
        %v1234 = vpop.xlane.xlu0 %1233
        %v1235 = vmul.f32 %v1234, %v422
        %v1236 = vadd.f32 %v1235, 1e-05
        %v1237 = vrsqrt.pop %v1236
        %v1238 = vmul.f32 %v1237, %v1236
        %v1239 = vmul.f32 %v1238, %v1237
        %v1240 = vmul.f32 0.5, %v1239
        %v1241 = vsub.f32 1.5, %v1240
        %v1242 = vmul.f32 %v1237, %v1241
        %vm1243 = vweird.f32 %v1236
        %vm1244 = vweird.f32 %v1237
        %vm1245 = vmor %vm1243, %vm1244
        %v1246 = vsel %vm1245, %v1237, %v1242
        %v1247 = vmul.f32 %v1229, %v1246
        %v1248 = vperm.slane %v1230, 0
        %v1249 = vmul.f32 %v1247, %v1248
        %s1250 = scalar_lea.vmem %s6, 32
        %v1251 = vld [vmem:[%s1250] sm:$0xff]
        %v1252 = vld [vmem:[%s1250 + $0x8] sm:$0xff]
        %v1253 = vld [vmem:[%s1250 + $0x10] sm:$0xff]
        %v1254 = vld [vmem:[%s1250 + $0x18] sm:$0xff]
        %v1255 = vld [vmem:[%s7 + $0x1] sm:$0x1]
        %v1256 = vperm.slane %v1255, 0
        %v1258 = vsel %vm412, %v1249, 0
        %1260 = vmatpush.msra.mxu0 0.0
        %1261 = vmatpush.msra.mxu0 0.0
        %1262 = vmatpush.msra.mxu0 0.0
        %1263 = vmatpush.msra.mxu0 0.0
        %1264 = vmatpush.msra.mxu0 0.0
        %1265 = vmatpush.msra.mxu0 0.0
        %1266 = vmatpush.msra.mxu0 0.0
        %1267 = vmatpush.msra.mxu0 0.0
        %1268 = vmatpush.msra.mxu0 0.0
        %1269 = vmatpush.msra.mxu0 0.0
        %1270 = vmatpush.msra.mxu0 0.0
        %1271 = vmatpush.msra.mxu0 0.0
        %1272 = vmatpush.msra.mxu0 %v1254
        %1273 = vmatpush.msra.mxu0 %v1253
        %1274 = vmatpush.msra.mxu0 %v1252
        %1275 = vmatpush.msra.mxu0 %v1251
        %1276 = vmatmul.f32.gmra.mxu0 %v1258
        %v1277 = vpop.f32.mrf.mxu0
        %v1278 = vadd.f32 %v1256, %v1277
        %1279 = vdwg.mxu0
        %v1280 = vmul.f32 %v1278, 0.5
        %v1281 = vmul.f32 %v1278, 0.44715
        %v1282 = vmul.f32 %v1281, %v1278
        %v1283 = vmul.f32 %v1282, %v1278
        %v1284 = vadd.f32 %v1278, %v1283
        %v1285 = vmul.f32 %v1284, 0.7978845
        %v1286 = vtanh.pop %v1285
        %v1287 = vadd.f32 %v1286, 1.0
        %v1288 = vmul.f32 %v1280, %v1287
        %s1289 = scalar_lea.vmem %s8, 128
        %v1290 = vld [vmem:[%s1289] sm:$0xff]
        %v1291 = vld [vmem:[%s1289 + $0x8] sm:$0xff]
        %v1292 = vld [vmem:[%s1289 + $0x10] sm:$0xff]
        %v1293 = vld [vmem:[%s1289 + $0x18] sm:$0xff]
        %v1294 = vld [vmem:[%s1289 + $0x20] sm:$0xff]
        %v1295 = vld [vmem:[%s1289 + $0x28] sm:$0xff]
        %v1296 = vld [vmem:[%s1289 + $0x30] sm:$0xff]
        %v1297 = vld [vmem:[%s1289 + $0x38] sm:$0xff]
        %v1298 = vld [vmem:[%s1289 + $0x40] sm:$0xff]
        %v1299 = vld [vmem:[%s1289 + $0x48] sm:$0xff]
        %v1300 = vld [vmem:[%s1289 + $0x50] sm:$0xff]
        %v1301 = vld [vmem:[%s1289 + $0x58] sm:$0xff]
        %v1302 = vld [vmem:[%s1289 + $0x60] sm:$0xff]
        %v1303 = vld [vmem:[%s1289 + $0x68] sm:$0xff]
        %v1304 = vld [vmem:[%s1289 + $0x70] sm:$0xff]
        %v1305 = vld [vmem:[%s1289 + $0x78] sm:$0xff]
        %1306 = vmatpush.msra.mxu0 %v1305
        %1307 = vmatpush.msra.mxu0 %v1304
        %1308 = vmatpush.msra.mxu0 %v1303
        %1309 = vmatpush.msra.mxu0 %v1302
        %1310 = vmatpush.msra.mxu0 %v1301
        %1311 = vmatpush.msra.mxu0 %v1300
        %1312 = vmatpush.msra.mxu0 %v1299
        %1313 = vmatpush.msra.mxu0 %v1298
        %1314 = vmatpush.msra.mxu0 %v1297
        %1315 = vmatpush.msra.mxu0 %v1296
        %1316 = vmatpush.msra.mxu0 %v1295
        %1317 = vmatpush.msra.mxu0 %v1294
        %1318 = vmatpush.msra.mxu0 %v1293
        %1319 = vmatpush.msra.mxu0 %v1292
        %1320 = vmatpush.msra.mxu0 %v1291
        %1321 = vmatpush.msra.mxu0 %v1290
        %1322 = vmatmul.f32.gmra.mxu0 %v1288
        %v1323 = vpop.f32.mrf.mxu0
        %v1324 = vadd.f32 0.0, %v1323
        %1325 = vdwg.mxu0
        %v1326 = vadd.f32 %v1229, %v1324
        %v1327 = vld [vmem:[%s9 + $0x1] sm:$0x1]
        %v1328 = vperm.slane %v1327, 0
        %v1329 = vadd.f32 %v1326, %v1328
        %v1330 = vld [vmem:[%s10] sm:$0x1]
        %v1331 = vmul.f32 %v1329, %v1329
        %v1332 = vsel %vm412, %v1331, 0.0
        %1333 = vadd.xlane.f32.xlu0 %v1332
        %v1334 = vpop.xlane.xlu0 %1333
        %v1335 = vmul.f32 %v1334, %v422
        %v1336 = vadd.f32 %v1335, 1e-05
        %v1337 = vrsqrt.pop %v1336
        %v1338 = vmul.f32 %v1337, %v1336
        %v1339 = vmul.f32 %v1338, %v1337
        %v1340 = vmul.f32 0.5, %v1339
        %v1341 = vsub.f32 1.5, %v1340
        %v1342 = vmul.f32 %v1337, %v1341
        %vm1343 = vweird.f32 %v1336
        %vm1344 = vweird.f32 %v1337
        %vm1345 = vmor %vm1343, %vm1344
        %v1346 = vsel %vm1345, %v1337, %v1342
        %v1347 = vmul.f32 %v1329, %v1346
        %v1349 = vperm.slane %v1330, 0
        %v1351 = vmul.f32 %v1347, %v1349
        %v1352 = vld [vmem:[%s11] sm:$0xff]
        %v1353 = vld [vmem:[%s11 + $0x8] sm:$0xff]
        %v1354 = vld [vmem:[%s11 + $0x10] sm:$0xff]
        %v1355 = vld [vmem:[%s11 + $0x18] sm:$0xff]
        %v1357 = vsel %vm412, %v1351, 0
        %1359 = vmatpush.msra.mxu0 0.0
        %1360 = vmatpush.msra.mxu0 0.0
        %1361 = vmatpush.msra.mxu0 0.0
        %1362 = vmatpush.msra.mxu0 0.0
        %1363 = vmatpush.msra.mxu0 0.0
        %1364 = vmatpush.msra.mxu0 0.0
        %1365 = vmatpush.msra.mxu0 0.0
        %1366 = vmatpush.msra.mxu0 0.0
        %1367 = vmatpush.msra.mxu0 0.0
        %1368 = vmatpush.msra.mxu0 0.0
        %1369 = vmatpush.msra.mxu0 0.0
        %1370 = vmatpush.msra.mxu0 0.0
        %1371 = vmatpush.msra.mxu0 %v1355
        %1372 = vmatpush.msra.mxu0 %v1354
        %1373 = vmatpush.msra.mxu0 %v1353
        %1374 = vmatpush.msra.mxu0 %v1352
        %1375 = vmatmul.f32.gmra.mxu0 %v1357
        %v1376 = vpop.f32.mrf.mxu0
        %v1377 = vadd.f32 0.0, %v1376
        %1378 = vdwg.mxu0
        %1379 = vst [vmem:[%s404] sm:$0xff] %v1377
        %s1380 = sand.u32 %s291, 1
        %s1381 = scalar_lea.sflag [#allocation4], %s1380
        %s1382 = sand.u32 %s291, 1
        %s1383 = smul.addr %s1382, 8
        %s1384 = scalar_lea.vmem [#allocation3], %s1383
        // Predicated region
        $region69: #{tpu_custom_call.1} parent=67 // pred_check
          %p1385 = pneg %p301
        $region70: #{tpu_custom_call.1} parent=67 // pred_check_branch
          %1387 = sbr.rel (%p1385) target = $region72
        $region71: #{tpu_custom_call.1} parent=67 // pred_region
          %1389 = vsyncadd %s1381, 0
          %s1390 = smul.addr %s26, 8
          %s1391 = scalar_lea.hbm %s12, %s1390
          %s1393 = sshll.u32 %s1384, 4
          %s1394 = int_to_ptr.vmem [resolvable:$true] %s1393
          %s1395 = sshll.u32 %s1391, 4
          %s1396 = int_to_ptr.hbm [resolvable:$true] %s1395
          %1398 = dma.vmem_to_hbm [thread:$0]  %s1394, 128, %s1396, %s1381
        $region72: #{tpu_custom_call.1} parent=67 // pred_fallthru
          _
      $region68: #{tpu_custom_call.1} parent=5 // pred_fallthru
        _
      %p1399 = scmp.le.s32.totalorder 2, %s21
      // Predicated region
      $region73: #{tpu_custom_call.1} parent=5 // pred_check
        %p1400 = pneg %p1399
      $region74: #{tpu_custom_call.1} parent=5 // pred_check_branch
        %1402 = sbr.rel (%p1400) target = $region76
      $region75: #{tpu_custom_call.1} parent=5 // pred_region
        %s1403 = ssub.s32 %s21, 2
        // Predicated region
        $region77: #{tpu_custom_call.1} parent=75 // pred_check
          %p1404 = pneg %p307
        $region78: #{tpu_custom_call.1} parent=75 // pred_check_branch
          %1406 = sbr.rel (%p1404) target = $region80
        $region79: #{tpu_custom_call.1} parent=75 // pred_region
          %s1407 = sand.u32 %s292, 1
          %s1408 = scalar_lea.sflag [#allocation4], %s1407
          %s1409 = sand.u32 %s292, 1
          %s1410 = smul.addr %s1409, 8
          %s1411 = scalar_lea.vmem [#allocation3], %s1410
          %1413 = dma.done %s1408, 128
        $region80: #{tpu_custom_call.1} parent=75 // pred_fallthru
          _
      $region76: #{tpu_custom_call.1} parent=5 // pred_fallthru
        _
    $region6: #{tpu_custom_call.1} parent=1 // loop_footer
      %s25 = sadd.s32 1, %s21
    $region7: #{tpu_custom_call.1} parent=1 // loop_footer_branch
      %20 = sbr.rel target = $region3
    $region8: #{tpu_custom_call.1} parent=1 // loop_exit
      _
    %1414 = vsyncpa [#allocation4], 1
    %s1415 = scalar_lea.sflag [#allocation4], 1
    %1416 = vsyncpa %s1415, 1

</llo_original>
